<compile_context>
chip_gen: v7x
topology: tpu7x:2x2x1
jax: 0.10.0
libtpu: 0.0.40
codegen_flags: <defaults>
</compile_context>

<pallas_src>
import functools
import re

import jax
import jax.numpy as jnp
import numpy as np
from jax.experimental import pallas as pl
from jax.experimental.pallas import tpu as pltpu

_LN_EPS = 1e-5  # nn.LayerNorm default


# ----------------------------------------------------------------------------
# Kernel
# ----------------------------------------------------------------------------
def pre_ln_ff_kernel(x_ref, w1_ref, b1_ref, w2_ref, b2_ref, o_ref, *, bf16_gelu):
    # x_ref: (TM, D) row tile.  w1_ref: (D, H) bf16 with the LN affine folded
    # in; w2_ref: (H, D) bf16; biases are f32 rows.
    x = x_ref[...].astype(jnp.float32)                        # (TM, D)

    # ---- LayerNorm statistics (f32, over last dim); affine folded into W1/b1.
    mu = jnp.mean(x, axis=-1, keepdims=True)
    xc = x - mu
    var = jnp.mean(xc * xc, axis=-1, keepdims=True)
    xn = xc * jax.lax.rsqrt(var + _LN_EPS)                    # EUP rsqrt

    # ---- Linear(D,H) -> GELU -> Linear(H,D): bf16 MXU inputs, f32 accumulate.
    h = jnp.dot(xn.astype(jnp.bfloat16), w1_ref[...],
                preferred_element_type=jnp.float32) + b1_ref[...]
    if bf16_gelu:
        # v6e/v7x: bf16 EUP/VPU path (~2x f32); feeds the bf16 MXU input anyway.
        h = jax.nn.gelu(h.astype(jnp.bfloat16), approximate=True)
    else:
        # v5e: no bf16 VPU/EUP -> keep GELU in f32, cast only for the MXU.
        h = jax.nn.gelu(h, approximate=True).astype(jnp.bfloat16)
    y = jnp.dot(h, w2_ref[...], preferred_element_type=jnp.float32) + b2_ref[...]

    o_ref[...] = y.astype(o_ref.dtype)


# ----------------------------------------------------------------------------
# Wrapper helpers
# ----------------------------------------------------------------------------
def _tpu_generation():
    """Best-effort TPU generation number (5, 6, 7, ...); defaults to 6."""
    try:
        kind = jax.devices()[0].device_kind.lower()
    except Exception:
        return 6
    m = re.search(r"(\d+)", kind)
    return int(m.group(1)) if m else 6


def _round_up(x, m):
    return ((x + m - 1) // m) * m


def _pick_tm(m_padded, two_cores):
    """Row-tile size.  256 preferred (full MXU M-tile, less LN vreg pressure
    than 512).  On v7x (2 TCs) require >=2 grid steps so both cores get work;
    on single-TC chips a single big step amortizes the ~0.35us/step overhead."""
    if two_cores:
        for tm in (256, 512, 128):
            if m_padded % tm == 0 and m_padded // tm >= 2:
                return tm
    else:
        if m_padded <= 1024:
            return m_padded
    for tm in (256, 512, 128):
        if m_padded % tm == 0:
            return tm
    return m_padded


# ----------------------------------------------------------------------------
# Public entry point
# ----------------------------------------------------------------------------
def pre_layer_norm_ff(x, gamma, beta, w1, b1, w2, b2, *, tm=None):
    """fn(LayerNorm(x)) with fn = FeedForward: Linear(D,H) -> GELU -> Linear(H,D)."""
    B, S, D = x.shape
    H = w1.shape[1]
    M = B * S

    gen = _tpu_generation()
    two_cores = gen >= 7
    bf16_gelu = gen >= 6                      # v5e has no bf16 VPU/EUP path
    vmem_limit = {5: 96, 6: 64, 7: 48}.get(gen, 64) * 1024 * 1024

    # Flatten (B, S) -> rows; pad to a lane/sublane-friendly row count so the
    # kernel never sees a ragged block (avoids masked partial stores).
    x2 = x.reshape(M, D)
    pad_to = 128 if M >= 128 else 8
    Mp = _round_up(M, pad_to)
    if Mp != M:
        x2 = jnp.pad(x2, ((0, Mp - M), (0, 0)))

    if tm is None:
        tm = _pick_tm(Mp, two_cores)
    assert Mp % tm == 0

    # Fold the LayerNorm affine into the first Linear (done once, in f32,
    # before the bf16 cast):  h = (xn*gamma + beta) @ W1 + b1
    #                           = xn @ (gamma[:,None]*W1) + (beta @ W1 + b1)
    f32 = jnp.float32
    w1_f = gamma.reshape(D, 1).astype(f32) * w1.astype(f32)
    b1_f = jnp.dot(beta.astype(f32), w1.astype(f32)) + b1.reshape(H).astype(f32)

    w1b = w1_f.astype(jnp.bfloat16)                  # (D, H) bf16, affine folded
    w2b = w2.astype(jnp.bfloat16)                    # (H, D) bf16
    b1r = b1_f.reshape(1, H)
    b2r = b2.reshape(1, D).astype(f32)

    cost = pl.CostEstimate(
        flops=4 * Mp * D * H + 10 * Mp * D,          # two matmuls + LN epilogue
        transcendentals=Mp * H + Mp,                 # tanh-GELU + rsqrt
        bytes_accessed=(x2.size + Mp * D) * x2.dtype.itemsize
        + (w1b.size + w2b.size) * 2
        + (b1r.size + b2r.size) * 4,
    )

    kernel = functools.partial(pre_ln_ff_kernel, bf16_gelu=bf16_gelu)

    out = pl.pallas_call(
        kernel,
        out_shape=jax.ShapeDtypeStruct((Mp, D), x.dtype),
        grid_spec=pl.GridSpec(
            grid=(Mp // tm,),
            in_specs=[
                pl.BlockSpec((tm, D), lambda i: (i, 0)),   # x row tile
                pl.BlockSpec((D, H), lambda i: (0, 0)),    # W1 (affine-folded, bf16)
                pl.BlockSpec((1, H), lambda i: (0, 0)),    # b1 (folded, f32)
                pl.BlockSpec((H, D), lambda i: (0, 0)),    # W2 (bf16)
                pl.BlockSpec((1, D), lambda i: (0, 0)),    # b2 (f32)
            ],
            out_specs=pl.BlockSpec((tm, D), lambda i: (i, 0)),
        ),
        compiler_params=pltpu.CompilerParams(
            dimension_semantics=("parallel",),       # row tiles are independent
            vmem_limit_bytes=vmem_limit,
        ),
        cost_estimate=cost,
    )(x2, w1b, b1r, w2b, b2r)

    return out[:M].reshape(B, S, D)


# ----------------------------------------------------------------------------
# References
# ----------------------------------------------------------------------------
def _reference_matched(x, gamma, beta, w1, b1, w2, b2, bf16_gelu):
    """Pure-JAX reference replaying the kernel's exact dtype path."""
    B, S, D = x.shape
    H = w1.shape[1]
    xf = x.astype(jnp.float32).reshape(-1, D)
    mu = xf.mean(-1, keepdims=True)
    xc = xf - mu
    var = (xc * xc).mean(-1, keepdims=True)
    xn = xc * jax.lax.rsqrt(var + _LN_EPS)
    w1_f = gamma.reshape(D, 1) * w1
    b1_f = beta @ w1 + b1.reshape(H)
    h = jnp.dot(xn.astype(jnp.bfloat16), w1_f.astype(jnp.bfloat16),
                preferred_element_type=jnp.float32) + b1_f
    if bf16_gelu:
        h = jax.nn.gelu(h.astype(jnp.bfloat16), approximate=True)
    else:
        h = jax.nn.gelu(h, approximate=True).astype(jnp.bfloat16)
    y = jnp.dot(h, w2.astype(jnp.bfloat16),
                preferred_element_type=jnp.float32) + b2.reshape(D)
    return y.reshape(B, S, D)


def _reference_f32(x, gamma, beta, w1, b1, w2, b2):
    """Full-f32 PyTorch-equivalent math: LayerNorm -> Linear -> GELU(erf) -> Linear."""
    D = x.shape[-1]
    xf = x.astype(jnp.float32)
    mu = xf.mean(-1, keepdims=True)
    var = ((xf - mu) ** 2).mean(-1, keepdims=True)
    xn = (xf - mu) * jax.lax.rsqrt(var + _LN_EPS)
    xn = xn * gamma + beta
    h = jnp.dot(xn, w1) + b1.reshape(-1)
    h = jax.nn.gelu(h, approximate=False)            # nn.GELU() exact erf
    return jnp.dot(h, w2) + b2.reshape(D)


# ----------------------------------------------------------------------------
# Demo / self-test
# ----------------------------------------------------------------------------
if __name__ == "__main__":
    # Small but MXU/lane-friendly shapes: M = B*S = 512 rows, D = 128, H = 256.
    B, S, D, H = 2, 256, 128, 256

    key = jax.random.PRNGKey(0)
    kx, kg, kb, k1, k2, k3, k4 = jax.random.split(key, 7)

    x = jax.random.normal(kx, (B, S, D), dtype=jnp.float32)
    gamma = 1.0 + 0.1 * jax.random.normal(kg, (D,), dtype=jnp.float32)
    beta = 0.01 * jax.random.normal(kb, (D,), dtype=jnp.float32)
    w1 = jax.random.normal(k1, (D, H), dtype=jnp.float32) * (1.0 / np.sqrt(D))
    b1 = 0.01 * jax.random.normal(k2, (H,), dtype=jnp.float32)
    w2 = jax.random.normal(k3, (H, D), dtype=jnp.float32) * (1.0 / np.sqrt(H))
    b2 = 0.01 * jax.random.normal(k4, (D,), dtype=jnp.float32)

    out = pre_layer_norm_ff(x, gamma, beta, w1, b1, w2, b2)
    out = jax.block_until_ready(out)
    assert out.shape == (B, S, D)

    # Tight check against a reference replaying the kernel's dtype path.
    bf16_gelu = _tpu_generation() >= 6
    ref_matched = _reference_matched(x, gamma, beta, w1, b1, w2, b2, bf16_gelu)
    assert np.allclose(np.asarray(out), np.asarray(ref_matched),
                       atol=5e-3, rtol=5e-3), "mismatch vs dtype-matched reference"

    # Loose check against the full-f32 PyTorch-equivalent math (erf GELU).
    ref_f32 = _reference_f32(x, gamma, beta, w1, b1, w2, b2)
    assert np.allclose(np.asarray(out), np.asarray(ref_f32),
                       atol=6e-2, rtol=6e-2), "mismatch vs f32 reference"

    print("KERNEL_OK")
</pallas_src>

<mosaic_0001>
module attributes {stable_mosaic.version = 11 : i64} {
  func.func @pre_ln_ff_kernel(%arg0: i32, %arg1: memref<512x128xf32, #tpu.memory_space<vmem>>, %arg2: memref<128x256xbf16, #tpu.memory_space<vmem>>, %arg3: memref<1x256xf32, #tpu.memory_space<vmem>>, %arg4: memref<256x128xbf16, #tpu.memory_space<vmem>>, %arg5: memref<1x128xf32, #tpu.memory_space<vmem>>, %arg6: memref<512x128xf32, #tpu.memory_space<vmem>>) attributes {dimension_semantics = [#tpu.dimension_semantics<parallel>], iteration_bounds = array<i64: 1>, scalar_prefetch = 0 : i64, scratch_operands = 0 : i64, tpu.core_type = #tpu.core_type<tc>, window_params = [{transform_indices = @transform_0, window_bounds = array<i64: 512, 128>}, {pipeline_mode = #tpu.pipeline_mode<synchronous>, transform_indices = @transform_1, window_bounds = array<i64: 128, 256>}, {pipeline_mode = #tpu.pipeline_mode<synchronous>, transform_indices = @transform_2, window_bounds = array<i64: 1, 256>}, {pipeline_mode = #tpu.pipeline_mode<synchronous>, transform_indices = @transform_3, window_bounds = array<i64: 256, 128>}, {pipeline_mode = #tpu.pipeline_mode<synchronous>, transform_indices = @transform_4, window_bounds = array<i64: 1, 128>}, {transform_indices = @transform_5, window_bounds = array<i64: 512, 128>}]} {
    %c0 = arith.constant 0 : index
    %c0_0 = arith.constant 0 : index
    %0 = vector.load %arg1[%c0, %c0_0] : memref<512x128xf32, #tpu.memory_space<vmem>>, vector<512x128xf32>
    %cst = arith.constant dense<0.000000e+00> : vector<512xf32>
    %1 = vector.multi_reduction <add>, %0, %cst [1] : vector<512x128xf32> to vector<512xf32>
    %2 = vector.shape_cast %1 : vector<512xf32> to vector<512x1xf32>
    %cst_1 = arith.constant 1.280000e+02 : f32
    %3 = vector.broadcast %cst_1 : f32 to vector<512x1xf32>
    %4 = arith.divf %2, %3 : vector<512x1xf32>
    %5 = vector.broadcast %4 : vector<512x1xf32> to vector<512x128xf32>
    %6 = arith.subf %0, %5 : vector<512x128xf32>
    %7 = arith.mulf %6, %6 : vector<512x128xf32>
    %cst_2 = arith.constant dense<0.000000e+00> : vector<512xf32>
    %8 = vector.multi_reduction <add>, %7, %cst_2 [1] : vector<512x128xf32> to vector<512xf32>
    %9 = vector.shape_cast %8 : vector<512xf32> to vector<512x1xf32>
    %cst_3 = arith.constant 1.280000e+02 : f32
    %10 = vector.broadcast %cst_3 : f32 to vector<512x1xf32>
    %11 = arith.divf %9, %10 : vector<512x1xf32>
    %cst_4 = arith.constant 9.99999974E-6 : f32
    %12 = vector.broadcast %cst_4 : f32 to vector<512x1xf32>
    %13 = arith.addf %11, %12 : vector<512x1xf32>
    %14 = math.rsqrt %13 : vector<512x1xf32>
    %15 = vector.broadcast %14 : vector<512x1xf32> to vector<512x128xf32>
    %16 = arith.mulf %6, %15 : vector<512x128xf32>
    %17 = arith.truncf %16 : vector<512x128xf32> to vector<512x128xbf16>
    %c0_5 = arith.constant 0 : index
    %c0_6 = arith.constant 0 : index
    %18 = vector.load %arg2[%c0_5, %c0_6] : memref<128x256xbf16, #tpu.memory_space<vmem>>, vector<128x256xbf16>
    %cst_7 = arith.constant dense<0.000000e+00> : vector<512x256xf32>
    %19 = tpu.matmul %17, %18, %cst_7 {dimension_numbers = #tpu.dot_dimension_numbers<[1], [0], [0], [1], [0, 0, 1, 1], [], []>} : vector<512x128xbf16>, vector<128x256xbf16>, vector<512x256xf32> -> vector<512x256xf32>
    %c0_8 = arith.constant 0 : index
    %c0_9 = arith.constant 0 : index
    %20 = vector.load %arg3[%c0_8, %c0_9] : memref<1x256xf32, #tpu.memory_space<vmem>>, vector<1x256xf32>
    %21 = vector.broadcast %20 : vector<1x256xf32> to vector<512x256xf32>
    %22 = arith.addf %19, %21 : vector<512x256xf32>
    %23 = arith.truncf %22 : vector<512x256xf32> to vector<512x256xbf16>
    %24 = arith.mulf %23, %23 : vector<512x256xbf16>
    %25 = arith.mulf %23, %24 : vector<512x256xbf16>
    %cst_10 = arith.constant 4.467770e-02 : bf16
    %26 = vector.broadcast %cst_10 : bf16 to vector<512x256xbf16>
    %27 = arith.mulf %26, %25 : vector<512x256xbf16>
    %28 = arith.addf %23, %27 : vector<512x256xbf16>
    %cst_11 = arith.constant 7.968750e-01 : bf16
    %29 = vector.broadcast %cst_11 : bf16 to vector<512x256xbf16>
    %30 = arith.mulf %29, %28 : vector<512x256xbf16>
    %31 = math.tanh %30 : vector<512x256xbf16>
    %cst_12 = arith.constant 1.000000e+00 : bf16
    %32 = vector.broadcast %cst_12 : bf16 to vector<512x256xbf16>
    %33 = arith.addf %32, %31 : vector<512x256xbf16>
    %cst_13 = arith.constant 5.000000e-01 : bf16
    %34 = vector.broadcast %cst_13 : bf16 to vector<512x256xbf16>
    %35 = arith.mulf %34, %33 : vector<512x256xbf16>
    %36 = arith.mulf %23, %35 : vector<512x256xbf16>
    %c0_14 = arith.constant 0 : index
    %c0_15 = arith.constant 0 : index
    %37 = vector.load %arg4[%c0_14, %c0_15] : memref<256x128xbf16, #tpu.memory_space<vmem>>, vector<256x128xbf16>
    %cst_16 = arith.constant dense<0.000000e+00> : vector<512x128xf32>
    %38 = tpu.matmul %36, %37, %cst_16 {dimension_numbers = #tpu.dot_dimension_numbers<[1], [0], [0], [1], [0, 0, 1, 1], [], []>} : vector<512x256xbf16>, vector<256x128xbf16>, vector<512x128xf32> -> vector<512x128xf32>
    %c0_17 = arith.constant 0 : index
    %c0_18 = arith.constant 0 : index
    %39 = vector.load %arg5[%c0_17, %c0_18] : memref<1x128xf32, #tpu.memory_space<vmem>>, vector<1x128xf32>
    %40 = vector.broadcast %39 : vector<1x128xf32> to vector<512x128xf32>
    %41 = arith.addf %38, %40 : vector<512x128xf32>
    %c0_19 = arith.constant 0 : index
    %c0_20 = arith.constant 0 : index
    %42 = vector.load %arg6[%c0_19, %c0_20] : memref<512x128xf32, #tpu.memory_space<vmem>>, vector<512x128xf32>
    tpu.vector_store %arg6[%c0_19, %c0_20], %41 {strides = array<i32>} : memref<512x128xf32, #tpu.memory_space<vmem>>, vector<512x128xf32>,
    return
  }
  func.func @transform_0(%arg0: i32) -> (i32, i32) {
    %c0_i32 = arith.constant 0 : i32
    %c0_i32_0 = arith.constant 0 : i32
    return %arg0, %c0_i32 : i32, i32
  }
  func.func @transform_1(%arg0: i32) -> (i32, i32) {
    %c0_i32 = arith.constant 0 : i32
    %c0_i32_0 = arith.constant 0 : i32
    %c0_i32_1 = arith.constant 0 : i32
    return %c0_i32, %c0_i32_0 : i32, i32
  }
  func.func @transform_2(%arg0: i32) -> (i32, i32) {
    %c0_i32 = arith.constant 0 : i32
    %c0_i32_0 = arith.constant 0 : i32
    %c0_i32_1 = arith.constant 0 : i32
    return %c0_i32, %c0_i32_0 : i32, i32
  }
  func.func @transform_3(%arg0: i32) -> (i32, i32) {
    %c0_i32 = arith.constant 0 : i32
    %c0_i32_0 = arith.constant 0 : i32
    %c0_i32_1 = arith.constant 0 : i32
    return %c0_i32, %c0_i32_0 : i32, i32
  }
  func.func @transform_4(%arg0: i32) -> (i32, i32) {
    %c0_i32 = arith.constant 0 : i32
    %c0_i32_0 = arith.constant 0 : i32
    %c0_i32_1 = arith.constant 0 : i32
    return %c0_i32, %c0_i32_0 : i32, i32
  }
  func.func @transform_5(%arg0: i32) -> (i32, i32) {
    %c0_i32 = arith.constant 0 : i32
    %c0_i32_0 = arith.constant 0 : i32
    return %arg0, %c0_i32 : i32, i32
  }
}

</mosaic_0001>

<llo_original>
// kernel: tpu_custom_call.1
$region0: #{tpu_custom_call.1}
  #allocation0 [shape = 'u32[]', space=smem, size = 0x4, offset = 0x4, fixed_abs, tag = 'smem constant byte address 0x4 - core index']
  #allocation1 [shape = 'u32[144,128]{1,0:T(1,128)}', space=vmem, size = 0x12000, scoped, tag = 'internal scratch']
  %s0 = inlined_call_operand.hbm [shape: f32[512,128], index: 0, kind: input, shape index: {}]
  %s1 = inlined_call_operand.hbm [shape: bf16[128,256], index: 1, kind: input, shape index: {}]
  %s2 = inlined_call_operand.hbm [shape: f32[1,256], index: 2, kind: input, shape index: {}]
  %s3 = inlined_call_operand.hbm [shape: bf16[256,128], index: 3, kind: input, shape index: {}]
  %s4 = inlined_call_operand.hbm [shape: f32[1,128], index: 4, kind: input, shape index: {}]
  %s5 = inlined_call_operand.hbm [shape: f32[512,128], index: 5, kind: output, shape index: {}]
  %s6 = sld [smem:[#allocation0]]
  $region50: #{tpu_custom_call.1} parent=0
    _
  %s8 = ssub.s32 1, %s6
  %s9 = scalar_select 0, %s8, %s6
  $region1: #{tpu_custom_call.1} parent=0
    #allocation2 [shape = 'u8[262144]{0}', space=vmem, size = 0x40000, scoped, tag = 'input window, operand 0, single buffered']
    #allocation3 [shape = 's32[1]{0}', space=sflag, size = 0x4, scoped, tag = 'scoped memory for tpu_custom_call.1']
    #allocation4 [shape = 's32[1]{0}', space=sflag, size = 0x4, scoped, tag = 'scoped memory for tpu_custom_call.1']
    #allocation5 [shape = 'u8[65536]{0}', space=vmem, size = 0x10000, scoped, tag = 'input window, operand 1, single buffered']
    #allocation6 [shape = 's32[1]{0}', space=sflag, size = 0x4, scoped, tag = 'scoped memory for tpu_custom_call.1']
    #allocation7 [shape = 'u8[1024]{0}', space=vmem, size = 0x400, scoped, tag = 'input window, operand 2, single buffered']
    #allocation8 [shape = 'u8[65536]{0}', space=vmem, size = 0x10000, scoped, tag = 'input window, operand 3, single buffered']
    #allocation9 [shape = 's32[1]{0}', space=sflag, size = 0x4, scoped, tag = 'scoped memory for tpu_custom_call.1']
    #allocation10 [shape = 'u8[512]{0}', space=vmem, size = 0x400, scoped, tag = 'input window, operand 4, single buffered']
    #allocation11 [shape = 'u8[262144]{0}', space=vmem, size = 0x40000, scoped, tag = 'output window, operand 0, single buffered']
    %10 = vsyncpa [#allocation3], 0
    %11 = vsyncpa [#allocation6], 0
    %12 = vsyncpa [#allocation9], 0
    %13 = vsyncpa [#allocation4], 0
    // Predicated region
    $region2: #{tpu_custom_call.1} parent=1 // pred_check
      _
    $region3: #{tpu_custom_call.1} parent=1 // pred_check_branch
      %15 = sbr.rel (0) target = $region5
    $region4: #{tpu_custom_call.1} parent=1 // pred_region
      %s17 = ssub.s32 8192, 8192
      %18 = vsyncadd [#allocation3], %s17
      %s19 = sshll.u32 [#allocation2], 4
      %s20 = int_to_ptr.vmem [resolvable:$true] %s19
      %25 = dma.hbm_to_vmem [thread:$0]  %s0, 8192, %s20, [#allocation3], 128, 128, 8
    $region5: #{tpu_custom_call.1} parent=1 // pred_fallthru
      _
    // Predicated region
    $region6: #{tpu_custom_call.1} parent=1 // pred_check
      _
    $region7: #{tpu_custom_call.1} parent=1 // pred_check_branch
      %27 = sbr.rel (0) target = $region9
    $region8: #{tpu_custom_call.1} parent=1 // pred_region
      %s29 = ssub.s32 2048, 2048
      %30 = vsyncadd [#allocation6], %s29
      %s31 = sshll.u32 [#allocation5], 4
      %s32 = int_to_ptr.vmem [resolvable:$true] %s31
      %37 = dma.hbm_to_vmem [thread:$0]  %s1, 2048, %s32, [#allocation6], 128, 128, 8
    $region9: #{tpu_custom_call.1} parent=1 // pred_fallthru
      _
    // Predicated region
    $region10: #{tpu_custom_call.1} parent=1 // pred_check
      _
    $region11: #{tpu_custom_call.1} parent=1 // pred_check_branch
      %39 = sbr.rel (0) target = $region13
    $region12: #{tpu_custom_call.1} parent=1 // pred_region
      %s41 = ssub.s32 32, 32
      %42 = vsyncadd [#allocation6], %s41
      %s44 = sshll.u32 [#allocation7], 4
      %s45 = int_to_ptr.vmem [resolvable:$true] %s44
      %47 = dma.hbm_to_vmem [thread:$0]  %s2, 32, %s45, [#allocation6]
    $region13: #{tpu_custom_call.1} parent=1 // pred_fallthru
      _
    // Predicated region
    $region14: #{tpu_custom_call.1} parent=1 // pred_check
      _
    $region15: #{tpu_custom_call.1} parent=1 // pred_check_branch
      %49 = sbr.rel (0) target = $region17
    $region16: #{tpu_custom_call.1} parent=1 // pred_region
      %s51 = ssub.s32 2048, 2048
      %52 = vsyncadd [#allocation9], %s51
      %s53 = sshll.u32 [#allocation8], 4
      %s54 = int_to_ptr.vmem [resolvable:$true] %s53
      %59 = dma.hbm_to_vmem [thread:$0]  %s3, 2048, %s54, [#allocation9], 64, 64, 4
    $region17: #{tpu_custom_call.1} parent=1 // pred_fallthru
      _
    // Predicated region
    $region18: #{tpu_custom_call.1} parent=1 // pred_check
      _
    $region19: #{tpu_custom_call.1} parent=1 // pred_check_branch
      %61 = sbr.rel (0) target = $region21
    $region20: #{tpu_custom_call.1} parent=1 // pred_region
      %s63 = ssub.s32 16, 16
      %64 = vsyncadd [#allocation9], %s63
      %s66 = sshll.u32 [#allocation10], 4
      %s67 = int_to_ptr.vmem [resolvable:$true] %s66
      %69 = dma.hbm_to_vmem [thread:$0]  %s4, 16, %s67, [#allocation9]
    $region21: #{tpu_custom_call.1} parent=1 // pred_fallthru
      _
    // Predicated region
    $region22: #{tpu_custom_call.1} parent=1 // pred_check
      _
    $region23: #{tpu_custom_call.1} parent=1 // pred_check_branch
      %71 = sbr.rel (0) target = $region25
    $region24: #{tpu_custom_call.1} parent=1 // pred_region
      %72 = dma.done [#allocation3], 8192
    $region25: #{tpu_custom_call.1} parent=1 // pred_fallthru
      _
    // Predicated region
    $region26: #{tpu_custom_call.1} parent=1 // pred_check
      _
    $region27: #{tpu_custom_call.1} parent=1 // pred_check_branch
      %74 = sbr.rel (0) target = $region29
    $region28: #{tpu_custom_call.1} parent=1 // pred_region
      %75 = dma.done [#allocation6], 2048
    $region29: #{tpu_custom_call.1} parent=1 // pred_fallthru
      _
    // Predicated region
    $region30: #{tpu_custom_call.1} parent=1 // pred_check
      _
    $region31: #{tpu_custom_call.1} parent=1 // pred_check_branch
      %77 = sbr.rel (0) target = $region33
    $region32: #{tpu_custom_call.1} parent=1 // pred_region
      %78 = dma.done [#allocation6], 32
    $region33: #{tpu_custom_call.1} parent=1 // pred_fallthru
      _
    // Predicated region
    $region34: #{tpu_custom_call.1} parent=1 // pred_check
      _
    $region35: #{tpu_custom_call.1} parent=1 // pred_check_branch
      %80 = sbr.rel (0) target = $region37
    $region36: #{tpu_custom_call.1} parent=1 // pred_region
      %81 = dma.done [#allocation9], 2048
    $region37: #{tpu_custom_call.1} parent=1 // pred_fallthru
      _
    // Predicated region
    $region38: #{tpu_custom_call.1} parent=1 // pred_check
      _
    $region39: #{tpu_custom_call.1} parent=1 // pred_check_branch
      %83 = sbr.rel (0) target = $region41
    $region40: #{tpu_custom_call.1} parent=1 // pred_region
      %84 = dma.done [#allocation9], 16
    $region41: #{tpu_custom_call.1} parent=1 // pred_fallthru
      _
    %v90 = vld [vmem:[#allocation2] sm:$0xff]
    %v91 = vld [vmem:[#allocation2 + $0x8] sm:$0xff]
    %v92 = vld [vmem:[#allocation2 + $0x10] sm:$0xff]
    %v93 = vld [vmem:[#allocation2 + $0x18] sm:$0xff]
    %v94 = vld [vmem:[#allocation2 + $0x20] sm:$0xff]
    %v95 = vld [vmem:[#allocation2 + $0x28] sm:$0xff]
    %v96 = vld [vmem:[#allocation2 + $0x30] sm:$0xff]
    %v97 = vld [vmem:[#allocation2 + $0x38] sm:$0xff]
    %v98 = vld [vmem:[#allocation2 + $0x40] sm:$0xff]
    %v99 = vld [vmem:[#allocation2 + $0x48] sm:$0xff]
    %v100 = vld [vmem:[#allocation2 + $0x50] sm:$0xff]
    %v101 = vld [vmem:[#allocation2 + $0x58] sm:$0xff]
    %v102 = vld [vmem:[#allocation2 + $0x60] sm:$0xff]
    %v103 = vld [vmem:[#allocation2 + $0x68] sm:$0xff]
    %v104 = vld [vmem:[#allocation2 + $0x70] sm:$0xff]
    %v105 = vld [vmem:[#allocation2 + $0x78] sm:$0xff]
    %v106 = vld [vmem:[#allocation2 + $0x80] sm:$0xff]
    %v107 = vld [vmem:[#allocation2 + $0x88] sm:$0xff]
    %v108 = vld [vmem:[#allocation2 + $0x90] sm:$0xff]
    %v109 = vld [vmem:[#allocation2 + $0x98] sm:$0xff]
    %v110 = vld [vmem:[#allocation2 + $0xa0] sm:$0xff]
    %v111 = vld [vmem:[#allocation2 + $0xa8] sm:$0xff]
    %v112 = vld [vmem:[#allocation2 + $0xb0] sm:$0xff]
    %v113 = vld [vmem:[#allocation2 + $0xb8] sm:$0xff]
    %v114 = vld [vmem:[#allocation2 + $0xc0] sm:$0xff]
    %v115 = vld [vmem:[#allocation2 + $0xc8] sm:$0xff]
    %v116 = vld [vmem:[#allocation2 + $0xd0] sm:$0xff]
    %v117 = vld [vmem:[#allocation2 + $0xd8] sm:$0xff]
    %v118 = vld [vmem:[#allocation2 + $0xe0] sm:$0xff]
    %v119 = vld [vmem:[#allocation2 + $0xe8] sm:$0xff]
    %v120 = vld [vmem:[#allocation2 + $0xf0] sm:$0xff]
    %v121 = vld [vmem:[#allocation2 + $0xf8] sm:$0xff]
    %v122 = vld [vmem:[#allocation2 + $0x100] sm:$0xff]
    %v123 = vld [vmem:[#allocation2 + $0x108] sm:$0xff]
    %v124 = vld [vmem:[#allocation2 + $0x110] sm:$0xff]
    %v125 = vld [vmem:[#allocation2 + $0x118] sm:$0xff]
    %v126 = vld [vmem:[#allocation2 + $0x120] sm:$0xff]
    %v127 = vld [vmem:[#allocation2 + $0x128] sm:$0xff]
    %v128 = vld [vmem:[#allocation2 + $0x130] sm:$0xff]
    %v129 = vld [vmem:[#allocation2 + $0x138] sm:$0xff]
    %v130 = vld [vmem:[#allocation2 + $0x140] sm:$0xff]
    %v131 = vld [vmem:[#allocation2 + $0x148] sm:$0xff]
    %v132 = vld [vmem:[#allocation2 + $0x150] sm:$0xff]
    %v133 = vld [vmem:[#allocation2 + $0x158] sm:$0xff]
    %v134 = vld [vmem:[#allocation2 + $0x160] sm:$0xff]
    %v135 = vld [vmem:[#allocation2 + $0x168] sm:$0xff]
    %v136 = vld [vmem:[#allocation2 + $0x170] sm:$0xff]
    %v137 = vld [vmem:[#allocation2 + $0x178] sm:$0xff]
    %v138 = vld [vmem:[#allocation2 + $0x180] sm:$0xff]
    %v139 = vld [vmem:[#allocation2 + $0x188] sm:$0xff]
    %v140 = vld [vmem:[#allocation2 + $0x190] sm:$0xff]
    %v141 = vld [vmem:[#allocation2 + $0x198] sm:$0xff]
    %v142 = vld [vmem:[#allocation2 + $0x1a0] sm:$0xff]
    %v143 = vld [vmem:[#allocation2 + $0x1a8] sm:$0xff]
    %v144 = vld [vmem:[#allocation2 + $0x1b0] sm:$0xff]
    %v145 = vld [vmem:[#allocation2 + $0x1b8] sm:$0xff]
    %v146 = vld [vmem:[#allocation2 + $0x1c0] sm:$0xff]
    %v147 = vld [vmem:[#allocation2 + $0x1c8] sm:$0xff]
    %v148 = vld [vmem:[#allocation2 + $0x1d0] sm:$0xff]
    %v149 = vld [vmem:[#allocation2 + $0x1d8] sm:$0xff]
    %v150 = vld [vmem:[#allocation2 + $0x1e0] sm:$0xff]
    %v151 = vld [vmem:[#allocation2 + $0x1e8] sm:$0xff]
    %v152 = vld [vmem:[#allocation2 + $0x1f0] sm:$0xff]
    %v153 = vld [vmem:[#allocation2 + $0x1f8] sm:$0xff]
    %154 = vadd.xlane.f32.xlu0 %v90
    %v155 = vpop.xlane.xlu0 %154
    %156 = vadd.xlane.f32.xlu0 %v91
    %v157 = vpop.xlane.xlu0 %156
    %158 = vadd.xlane.f32.xlu0 %v92
    %v159 = vpop.xlane.xlu0 %158
    %160 = vadd.xlane.f32.xlu0 %v93
    %v161 = vpop.xlane.xlu0 %160
    %162 = vadd.xlane.f32.xlu0 %v94
    %v163 = vpop.xlane.xlu0 %162
    %164 = vadd.xlane.f32.xlu0 %v95
    %v165 = vpop.xlane.xlu0 %164
    %166 = vadd.xlane.f32.xlu0 %v96
    %v167 = vpop.xlane.xlu0 %166
    %168 = vadd.xlane.f32.xlu0 %v97
    %v169 = vpop.xlane.xlu0 %168
    %170 = vadd.xlane.f32.xlu0 %v98
    %v171 = vpop.xlane.xlu0 %170
    %172 = vadd.xlane.f32.xlu0 %v99
    %v173 = vpop.xlane.xlu0 %172
    %174 = vadd.xlane.f32.xlu0 %v100
    %v175 = vpop.xlane.xlu0 %174
    %176 = vadd.xlane.f32.xlu0 %v101
    %v177 = vpop.xlane.xlu0 %176
    %178 = vadd.xlane.f32.xlu0 %v102
    %v179 = vpop.xlane.xlu0 %178
    %180 = vadd.xlane.f32.xlu0 %v103
    %v181 = vpop.xlane.xlu0 %180
    %182 = vadd.xlane.f32.xlu0 %v104
    %v183 = vpop.xlane.xlu0 %182
    %184 = vadd.xlane.f32.xlu0 %v105
    %v185 = vpop.xlane.xlu0 %184
    %186 = vadd.xlane.f32.xlu0 %v106
    %v187 = vpop.xlane.xlu0 %186
    %188 = vadd.xlane.f32.xlu0 %v107
    %v189 = vpop.xlane.xlu0 %188
    %190 = vadd.xlane.f32.xlu0 %v108
    %v191 = vpop.xlane.xlu0 %190
    %192 = vadd.xlane.f32.xlu0 %v109
    %v193 = vpop.xlane.xlu0 %192
    %194 = vadd.xlane.f32.xlu0 %v110
    %v195 = vpop.xlane.xlu0 %194
    %196 = vadd.xlane.f32.xlu0 %v111
    %v197 = vpop.xlane.xlu0 %196
    %198 = vadd.xlane.f32.xlu0 %v112
    %v199 = vpop.xlane.xlu0 %198
    %200 = vadd.xlane.f32.xlu0 %v113
    %v201 = vpop.xlane.xlu0 %200
    %202 = vadd.xlane.f32.xlu0 %v114
    %v203 = vpop.xlane.xlu0 %202
    %204 = vadd.xlane.f32.xlu0 %v115
    %v205 = vpop.xlane.xlu0 %204
    %206 = vadd.xlane.f32.xlu0 %v116
    %v207 = vpop.xlane.xlu0 %206
    %208 = vadd.xlane.f32.xlu0 %v117
    %v209 = vpop.xlane.xlu0 %208
    %210 = vadd.xlane.f32.xlu0 %v118
    %v211 = vpop.xlane.xlu0 %210
    %212 = vadd.xlane.f32.xlu0 %v119
    %v213 = vpop.xlane.xlu0 %212
    %214 = vadd.xlane.f32.xlu0 %v120
    %v215 = vpop.xlane.xlu0 %214
    %216 = vadd.xlane.f32.xlu0 %v121
    %v217 = vpop.xlane.xlu0 %216
    %218 = vadd.xlane.f32.xlu0 %v122
    %v219 = vpop.xlane.xlu0 %218
    %220 = vadd.xlane.f32.xlu0 %v123
    %v221 = vpop.xlane.xlu0 %220
    %222 = vadd.xlane.f32.xlu0 %v124
    %v223 = vpop.xlane.xlu0 %222
    %224 = vadd.xlane.f32.xlu0 %v125
    %v225 = vpop.xlane.xlu0 %224
    %226 = vadd.xlane.f32.xlu0 %v126
    %v227 = vpop.xlane.xlu0 %226
    %228 = vadd.xlane.f32.xlu0 %v127
    %v229 = vpop.xlane.xlu0 %228
    %230 = vadd.xlane.f32.xlu0 %v128
    %v231 = vpop.xlane.xlu0 %230
    %232 = vadd.xlane.f32.xlu0 %v129
    %v233 = vpop.xlane.xlu0 %232
    %234 = vadd.xlane.f32.xlu0 %v130
    %v235 = vpop.xlane.xlu0 %234
    %236 = vadd.xlane.f32.xlu0 %v131
    %v237 = vpop.xlane.xlu0 %236
    %238 = vadd.xlane.f32.xlu0 %v132
    %v239 = vpop.xlane.xlu0 %238
    %240 = vadd.xlane.f32.xlu0 %v133
    %v241 = vpop.xlane.xlu0 %240
    %242 = vadd.xlane.f32.xlu0 %v134
    %v243 = vpop.xlane.xlu0 %242
    %244 = vadd.xlane.f32.xlu0 %v135
    %v245 = vpop.xlane.xlu0 %244
    %246 = vadd.xlane.f32.xlu0 %v136
    %v247 = vpop.xlane.xlu0 %246
    %248 = vadd.xlane.f32.xlu0 %v137
    %v249 = vpop.xlane.xlu0 %248
    %250 = vadd.xlane.f32.xlu0 %v138
    %v251 = vpop.xlane.xlu0 %250
    %252 = vadd.xlane.f32.xlu0 %v139
    %v253 = vpop.xlane.xlu0 %252
    %254 = vadd.xlane.f32.xlu0 %v140
    %v255 = vpop.xlane.xlu0 %254
    %256 = vadd.xlane.f32.xlu0 %v141
    %v257 = vpop.xlane.xlu0 %256
    %258 = vadd.xlane.f32.xlu0 %v142
    %v259 = vpop.xlane.xlu0 %258
    %260 = vadd.xlane.f32.xlu0 %v143
    %v261 = vpop.xlane.xlu0 %260
    %262 = vadd.xlane.f32.xlu0 %v144
    %v263 = vpop.xlane.xlu0 %262
    %264 = vadd.xlane.f32.xlu0 %v145
    %v265 = vpop.xlane.xlu0 %264
    %266 = vadd.xlane.f32.xlu0 %v146
    %v267 = vpop.xlane.xlu0 %266
    %268 = vadd.xlane.f32.xlu0 %v147
    %v269 = vpop.xlane.xlu0 %268
    %270 = vadd.xlane.f32.xlu0 %v148
    %v271 = vpop.xlane.xlu0 %270
    %272 = vadd.xlane.f32.xlu0 %v149
    %v273 = vpop.xlane.xlu0 %272
    %274 = vadd.xlane.f32.xlu0 %v150
    %v275 = vpop.xlane.xlu0 %274
    %276 = vadd.xlane.f32.xlu0 %v151
    %v277 = vpop.xlane.xlu0 %276
    %278 = vadd.xlane.f32.xlu0 %v152
    %v279 = vpop.xlane.xlu0 %278
    %280 = vadd.xlane.f32.xlu0 %v153
    %v281 = vpop.xlane.xlu0 %280
    %v282 = vrcp.pop 128.0
    %v283 = vmul.f32 %v155, %v282
    %v284 = vmul.f32 %v157, %v282
    %v285 = vmul.f32 %v159, %v282
    %v286 = vmul.f32 %v161, %v282
    %v287 = vmul.f32 %v163, %v282
    %v288 = vmul.f32 %v165, %v282
    %v289 = vmul.f32 %v167, %v282
    %v290 = vmul.f32 %v169, %v282
    %v291 = vmul.f32 %v171, %v282
    %v292 = vmul.f32 %v173, %v282
    %v293 = vmul.f32 %v175, %v282
    %v294 = vmul.f32 %v177, %v282
    %v295 = vmul.f32 %v179, %v282
    %v296 = vmul.f32 %v181, %v282
    %v297 = vmul.f32 %v183, %v282
    %v298 = vmul.f32 %v185, %v282
    %v299 = vmul.f32 %v187, %v282
    %v300 = vmul.f32 %v189, %v282
    %v301 = vmul.f32 %v191, %v282
    %v302 = vmul.f32 %v193, %v282
    %v303 = vmul.f32 %v195, %v282
    %v304 = vmul.f32 %v197, %v282
    %v305 = vmul.f32 %v199, %v282
    %v306 = vmul.f32 %v201, %v282
    %v307 = vmul.f32 %v203, %v282
    %v308 = vmul.f32 %v205, %v282
    %v309 = vmul.f32 %v207, %v282
    %v310 = vmul.f32 %v209, %v282
    %v311 = vmul.f32 %v211, %v282
    %v312 = vmul.f32 %v213, %v282
    %v313 = vmul.f32 %v215, %v282
    %v314 = vmul.f32 %v217, %v282
    %v315 = vmul.f32 %v219, %v282
    %v316 = vmul.f32 %v221, %v282
    %v317 = vmul.f32 %v223, %v282
    %v318 = vmul.f32 %v225, %v282
    %v319 = vmul.f32 %v227, %v282
    %v320 = vmul.f32 %v229, %v282
    %v321 = vmul.f32 %v231, %v282
    %v322 = vmul.f32 %v233, %v282
    %v323 = vmul.f32 %v235, %v282
    %v324 = vmul.f32 %v237, %v282
    %v325 = vmul.f32 %v239, %v282
    %v326 = vmul.f32 %v241, %v282
    %v327 = vmul.f32 %v243, %v282
    %v328 = vmul.f32 %v245, %v282
    %v329 = vmul.f32 %v247, %v282
    %v330 = vmul.f32 %v249, %v282
    %v331 = vmul.f32 %v251, %v282
    %v332 = vmul.f32 %v253, %v282
    %v333 = vmul.f32 %v255, %v282
    %v334 = vmul.f32 %v257, %v282
    %v335 = vmul.f32 %v259, %v282
    %v336 = vmul.f32 %v261, %v282
    %v337 = vmul.f32 %v263, %v282
    %v338 = vmul.f32 %v265, %v282
    %v339 = vmul.f32 %v267, %v282
    %v340 = vmul.f32 %v269, %v282
    %v341 = vmul.f32 %v271, %v282
    %v342 = vmul.f32 %v273, %v282
    %v343 = vmul.f32 %v275, %v282
    %v344 = vmul.f32 %v277, %v282
    %v345 = vmul.f32 %v279, %v282
    %v346 = vmul.f32 %v281, %v282
    %v347 = vsub.f32 %v90, %v283
    %v348 = vsub.f32 %v91, %v284
    %v349 = vsub.f32 %v92, %v285
    %v350 = vsub.f32 %v93, %v286
    %v351 = vsub.f32 %v94, %v287
    %v352 = vsub.f32 %v95, %v288
    %v353 = vsub.f32 %v96, %v289
    %v354 = vsub.f32 %v97, %v290
    %v355 = vsub.f32 %v98, %v291
    %v356 = vsub.f32 %v99, %v292
    %v357 = vsub.f32 %v100, %v293
    %v358 = vsub.f32 %v101, %v294
    %v359 = vsub.f32 %v102, %v295
    %v360 = vsub.f32 %v103, %v296
    %v361 = vsub.f32 %v104, %v297
    %v362 = vsub.f32 %v105, %v298
    %v363 = vsub.f32 %v106, %v299
    %v364 = vsub.f32 %v107, %v300
    %v365 = vsub.f32 %v108, %v301
    %v366 = vsub.f32 %v109, %v302
    %v367 = vsub.f32 %v110, %v303
    %v368 = vsub.f32 %v111, %v304
    %v369 = vsub.f32 %v112, %v305
    %v370 = vsub.f32 %v113, %v306
    %v371 = vsub.f32 %v114, %v307
    %v372 = vsub.f32 %v115, %v308
    %v373 = vsub.f32 %v116, %v309
    %v374 = vsub.f32 %v117, %v310
    %v375 = vsub.f32 %v118, %v311
    %v376 = vsub.f32 %v119, %v312
    %v377 = vsub.f32 %v120, %v313
    %v378 = vsub.f32 %v121, %v314
    %v379 = vsub.f32 %v122, %v315
    %v380 = vsub.f32 %v123, %v316
    %v381 = vsub.f32 %v124, %v317
    %v382 = vsub.f32 %v125, %v318
    %v383 = vsub.f32 %v126, %v319
    %v384 = vsub.f32 %v127, %v320
    %v385 = vsub.f32 %v128, %v321
    %v386 = vsub.f32 %v129, %v322
    %v387 = vsub.f32 %v130, %v323
    %v388 = vsub.f32 %v131, %v324
    %v389 = vsub.f32 %v132, %v325
    %v390 = vsub.f32 %v133, %v326
    %v391 = vsub.f32 %v134, %v327
    %v392 = vsub.f32 %v135, %v328
    %v393 = vsub.f32 %v136, %v329
    %v394 = vsub.f32 %v137, %v330
    %v395 = vsub.f32 %v138, %v331
    %v396 = vsub.f32 %v139, %v332
    %v397 = vsub.f32 %v140, %v333
    %v398 = vsub.f32 %v141, %v334
    %v399 = vsub.f32 %v142, %v335
    %v400 = vsub.f32 %v143, %v336
    %v401 = vsub.f32 %v144, %v337
    %v402 = vsub.f32 %v145, %v338
    %v403 = vsub.f32 %v146, %v339
    %v404 = vsub.f32 %v147, %v340
    %v405 = vsub.f32 %v148, %v341
    %v406 = vsub.f32 %v149, %v342
    %v407 = vsub.f32 %v150, %v343
    %v408 = vsub.f32 %v151, %v344
    %v409 = vsub.f32 %v152, %v345
    %v410 = vsub.f32 %v153, %v346
    %v411 = vmul.f32 %v347, %v347
    %v412 = vmul.f32 %v348, %v348
    %v413 = vmul.f32 %v349, %v349
    %v414 = vmul.f32 %v350, %v350
    %v415 = vmul.f32 %v351, %v351
    %v416 = vmul.f32 %v352, %v352
    %v417 = vmul.f32 %v353, %v353
    %v418 = vmul.f32 %v354, %v354
    %v419 = vmul.f32 %v355, %v355
    %v420 = vmul.f32 %v356, %v356
    %v421 = vmul.f32 %v357, %v357
    %v422 = vmul.f32 %v358, %v358
    %v423 = vmul.f32 %v359, %v359
    %v424 = vmul.f32 %v360, %v360
    %v425 = vmul.f32 %v361, %v361
    %v426 = vmul.f32 %v362, %v362
    %v427 = vmul.f32 %v363, %v363
    %v428 = vmul.f32 %v364, %v364
    %v429 = vmul.f32 %v365, %v365
    %v430 = vmul.f32 %v366, %v366
    %v431 = vmul.f32 %v367, %v367
    %v432 = vmul.f32 %v368, %v368
    %v433 = vmul.f32 %v369, %v369
    %v434 = vmul.f32 %v370, %v370
    %v435 = vmul.f32 %v371, %v371
    %v436 = vmul.f32 %v372, %v372
    %v437 = vmul.f32 %v373, %v373
    %v438 = vmul.f32 %v374, %v374
    %v439 = vmul.f32 %v375, %v375
    %v440 = vmul.f32 %v376, %v376
    %v441 = vmul.f32 %v377, %v377
    %v442 = vmul.f32 %v378, %v378
    %v443 = vmul.f32 %v379, %v379
    %v444 = vmul.f32 %v380, %v380
    %v445 = vmul.f32 %v381, %v381
    %v446 = vmul.f32 %v382, %v382
    %v447 = vmul.f32 %v383, %v383
    %v448 = vmul.f32 %v384, %v384
    %v449 = vmul.f32 %v385, %v385
    %v450 = vmul.f32 %v386, %v386
    %v451 = vmul.f32 %v387, %v387
    %v452 = vmul.f32 %v388, %v388
    %v453 = vmul.f32 %v389, %v389
    %v454 = vmul.f32 %v390, %v390
    %v455 = vmul.f32 %v391, %v391
    %v456 = vmul.f32 %v392, %v392
    %v457 = vmul.f32 %v393, %v393
    %v458 = vmul.f32 %v394, %v394
    %v459 = vmul.f32 %v395, %v395
    %v460 = vmul.f32 %v396, %v396
    %v461 = vmul.f32 %v397, %v397
    %v462 = vmul.f32 %v398, %v398
    %v463 = vmul.f32 %v399, %v399
    %v464 = vmul.f32 %v400, %v400
    %v465 = vmul.f32 %v401, %v401
    %v466 = vmul.f32 %v402, %v402
    %v467 = vmul.f32 %v403, %v403
    %v468 = vmul.f32 %v404, %v404
    %v469 = vmul.f32 %v405, %v405
    %v470 = vmul.f32 %v406, %v406
    %v471 = vmul.f32 %v407, %v407
    %v472 = vmul.f32 %v408, %v408
    %v473 = vmul.f32 %v409, %v409
    %v474 = vmul.f32 %v410, %v410
    %475 = vadd.xlane.f32.xlu0 %v411
    %v476 = vpop.xlane.xlu0 %475
    %477 = vadd.xlane.f32.xlu0 %v412
    %v478 = vpop.xlane.xlu0 %477
    %479 = vadd.xlane.f32.xlu0 %v413
    %v480 = vpop.xlane.xlu0 %479
    %481 = vadd.xlane.f32.xlu0 %v414
    %v482 = vpop.xlane.xlu0 %481
    %483 = vadd.xlane.f32.xlu0 %v415
    %v484 = vpop.xlane.xlu0 %483
    %485 = vadd.xlane.f32.xlu0 %v416
    %v486 = vpop.xlane.xlu0 %485
    %487 = vadd.xlane.f32.xlu0 %v417
    %v488 = vpop.xlane.xlu0 %487
    %489 = vadd.xlane.f32.xlu0 %v418
    %v490 = vpop.xlane.xlu0 %489
    %491 = vadd.xlane.f32.xlu0 %v419
    %v492 = vpop.xlane.xlu0 %491
    %493 = vadd.xlane.f32.xlu0 %v420
    %v494 = vpop.xlane.xlu0 %493
    %495 = vadd.xlane.f32.xlu0 %v421
    %v496 = vpop.xlane.xlu0 %495
    %497 = vadd.xlane.f32.xlu0 %v422
    %v498 = vpop.xlane.xlu0 %497
    %499 = vadd.xlane.f32.xlu0 %v423
    %v500 = vpop.xlane.xlu0 %499
    %501 = vadd.xlane.f32.xlu0 %v424
    %v502 = vpop.xlane.xlu0 %501
    %503 = vadd.xlane.f32.xlu0 %v425
    %v504 = vpop.xlane.xlu0 %503
    %505 = vadd.xlane.f32.xlu0 %v426
    %v506 = vpop.xlane.xlu0 %505
    %507 = vadd.xlane.f32.xlu0 %v427
    %v508 = vpop.xlane.xlu0 %507
    %509 = vadd.xlane.f32.xlu0 %v428
    %v510 = vpop.xlane.xlu0 %509
    %511 = vadd.xlane.f32.xlu0 %v429
    %v512 = vpop.xlane.xlu0 %511
    %513 = vadd.xlane.f32.xlu0 %v430
    %v514 = vpop.xlane.xlu0 %513
    %515 = vadd.xlane.f32.xlu0 %v431
    %v516 = vpop.xlane.xlu0 %515
    %517 = vadd.xlane.f32.xlu0 %v432
    %v518 = vpop.xlane.xlu0 %517
    %519 = vadd.xlane.f32.xlu0 %v433
    %v520 = vpop.xlane.xlu0 %519
    %521 = vadd.xlane.f32.xlu0 %v434
    %v522 = vpop.xlane.xlu0 %521
    %523 = vadd.xlane.f32.xlu0 %v435
    %v524 = vpop.xlane.xlu0 %523
    %525 = vadd.xlane.f32.xlu0 %v436
    %v526 = vpop.xlane.xlu0 %525
    %527 = vadd.xlane.f32.xlu0 %v437
    %v528 = vpop.xlane.xlu0 %527
    %529 = vadd.xlane.f32.xlu0 %v438
    %v530 = vpop.xlane.xlu0 %529
    %531 = vadd.xlane.f32.xlu0 %v439
    %v532 = vpop.xlane.xlu0 %531
    %533 = vadd.xlane.f32.xlu0 %v440
    %v534 = vpop.xlane.xlu0 %533
    %535 = vadd.xlane.f32.xlu0 %v441
    %v536 = vpop.xlane.xlu0 %535
    %537 = vadd.xlane.f32.xlu0 %v442
    %v538 = vpop.xlane.xlu0 %537
    %539 = vadd.xlane.f32.xlu0 %v443
    %v540 = vpop.xlane.xlu0 %539
    %541 = vadd.xlane.f32.xlu0 %v444
    %v542 = vpop.xlane.xlu0 %541
    %543 = vadd.xlane.f32.xlu0 %v445
    %v544 = vpop.xlane.xlu0 %543
    %545 = vadd.xlane.f32.xlu0 %v446
    %v546 = vpop.xlane.xlu0 %545
    %547 = vadd.xlane.f32.xlu0 %v447
    %v548 = vpop.xlane.xlu0 %547
    %549 = vadd.xlane.f32.xlu0 %v448
    %v550 = vpop.xlane.xlu0 %549
    %551 = vadd.xlane.f32.xlu0 %v449
    %v552 = vpop.xlane.xlu0 %551
    %553 = vadd.xlane.f32.xlu0 %v450
    %v554 = vpop.xlane.xlu0 %553
    %555 = vadd.xlane.f32.xlu0 %v451
    %v556 = vpop.xlane.xlu0 %555
    %557 = vadd.xlane.f32.xlu0 %v452
    %v558 = vpop.xlane.xlu0 %557
    %559 = vadd.xlane.f32.xlu0 %v453
    %v560 = vpop.xlane.xlu0 %559
    %561 = vadd.xlane.f32.xlu0 %v454
    %v562 = vpop.xlane.xlu0 %561
    %563 = vadd.xlane.f32.xlu0 %v455
    %v564 = vpop.xlane.xlu0 %563
    %565 = vadd.xlane.f32.xlu0 %v456
    %v566 = vpop.xlane.xlu0 %565
    %567 = vadd.xlane.f32.xlu0 %v457
    %v568 = vpop.xlane.xlu0 %567
    %569 = vadd.xlane.f32.xlu0 %v458
    %v570 = vpop.xlane.xlu0 %569
    %571 = vadd.xlane.f32.xlu0 %v459
    %v572 = vpop.xlane.xlu0 %571
    %573 = vadd.xlane.f32.xlu0 %v460
    %v574 = vpop.xlane.xlu0 %573
    %575 = vadd.xlane.f32.xlu0 %v461
    %v576 = vpop.xlane.xlu0 %575
    %577 = vadd.xlane.f32.xlu0 %v462
    %v578 = vpop.xlane.xlu0 %577
    %579 = vadd.xlane.f32.xlu0 %v463
    %v580 = vpop.xlane.xlu0 %579
    %581 = vadd.xlane.f32.xlu0 %v464
    %v582 = vpop.xlane.xlu0 %581
    %583 = vadd.xlane.f32.xlu0 %v465
    %v584 = vpop.xlane.xlu0 %583
    %585 = vadd.xlane.f32.xlu0 %v466
    %v586 = vpop.xlane.xlu0 %585
    %587 = vadd.xlane.f32.xlu0 %v467
    %v588 = vpop.xlane.xlu0 %587
    %589 = vadd.xlane.f32.xlu0 %v468
    %v590 = vpop.xlane.xlu0 %589
    %591 = vadd.xlane.f32.xlu0 %v469
    %v592 = vpop.xlane.xlu0 %591
    %593 = vadd.xlane.f32.xlu0 %v470
    %v594 = vpop.xlane.xlu0 %593
    %595 = vadd.xlane.f32.xlu0 %v471
    %v596 = vpop.xlane.xlu0 %595
    %597 = vadd.xlane.f32.xlu0 %v472
    %v598 = vpop.xlane.xlu0 %597
    %599 = vadd.xlane.f32.xlu0 %v473
    %v600 = vpop.xlane.xlu0 %599
    %601 = vadd.xlane.f32.xlu0 %v474
    %v602 = vpop.xlane.xlu0 %601
    %v603 = vmul.f32 %v476, %v282
    %v604 = vmul.f32 %v478, %v282
    %v605 = vmul.f32 %v480, %v282
    %v606 = vmul.f32 %v482, %v282
    %v607 = vmul.f32 %v484, %v282
    %v608 = vmul.f32 %v486, %v282
    %v609 = vmul.f32 %v488, %v282
    %v610 = vmul.f32 %v490, %v282
    %v611 = vmul.f32 %v492, %v282
    %v612 = vmul.f32 %v494, %v282
    %v613 = vmul.f32 %v496, %v282
    %v614 = vmul.f32 %v498, %v282
    %v615 = vmul.f32 %v500, %v282
    %v616 = vmul.f32 %v502, %v282
    %v617 = vmul.f32 %v504, %v282
    %v618 = vmul.f32 %v506, %v282
    %v619 = vmul.f32 %v508, %v282
    %v620 = vmul.f32 %v510, %v282
    %v621 = vmul.f32 %v512, %v282
    %v622 = vmul.f32 %v514, %v282
    %v623 = vmul.f32 %v516, %v282
    %v624 = vmul.f32 %v518, %v282
    %v625 = vmul.f32 %v520, %v282
    %v626 = vmul.f32 %v522, %v282
    %v627 = vmul.f32 %v524, %v282
    %v628 = vmul.f32 %v526, %v282
    %v629 = vmul.f32 %v528, %v282
    %v630 = vmul.f32 %v530, %v282
    %v631 = vmul.f32 %v532, %v282
    %v632 = vmul.f32 %v534, %v282
    %v633 = vmul.f32 %v536, %v282
    %v634 = vmul.f32 %v538, %v282
    %v635 = vmul.f32 %v540, %v282
    %v636 = vmul.f32 %v542, %v282
    %v637 = vmul.f32 %v544, %v282
    %v638 = vmul.f32 %v546, %v282
    %v639 = vmul.f32 %v548, %v282
    %v640 = vmul.f32 %v550, %v282
    %v641 = vmul.f32 %v552, %v282
    %v642 = vmul.f32 %v554, %v282
    %v643 = vmul.f32 %v556, %v282
    %v644 = vmul.f32 %v558, %v282
    %v645 = vmul.f32 %v560, %v282
    %v646 = vmul.f32 %v562, %v282
    %v647 = vmul.f32 %v564, %v282
    %v648 = vmul.f32 %v566, %v282
    %v649 = vmul.f32 %v568, %v282
    %v650 = vmul.f32 %v570, %v282
    %v651 = vmul.f32 %v572, %v282
    %v652 = vmul.f32 %v574, %v282
    %v653 = vmul.f32 %v576, %v282
    %v654 = vmul.f32 %v578, %v282
    %v655 = vmul.f32 %v580, %v282
    %v656 = vmul.f32 %v582, %v282
    %v657 = vmul.f32 %v584, %v282
    %v658 = vmul.f32 %v586, %v282
    %v659 = vmul.f32 %v588, %v282
    %v660 = vmul.f32 %v590, %v282
    %v661 = vmul.f32 %v592, %v282
    %v662 = vmul.f32 %v594, %v282
    %v663 = vmul.f32 %v596, %v282
    %v664 = vmul.f32 %v598, %v282
    %v665 = vmul.f32 %v600, %v282
    %v666 = vmul.f32 %v602, %v282
    %v667 = vadd.f32 %v603, 1e-05
    %v668 = vadd.f32 %v604, 1e-05
    %v669 = vadd.f32 %v605, 1e-05
    %v670 = vadd.f32 %v606, 1e-05
    %v671 = vadd.f32 %v607, 1e-05
    %v672 = vadd.f32 %v608, 1e-05
    %v673 = vadd.f32 %v609, 1e-05
    %v674 = vadd.f32 %v610, 1e-05
    %v675 = vadd.f32 %v611, 1e-05
    %v676 = vadd.f32 %v612, 1e-05
    %v677 = vadd.f32 %v613, 1e-05
    %v678 = vadd.f32 %v614, 1e-05
    %v679 = vadd.f32 %v615, 1e-05
    %v680 = vadd.f32 %v616, 1e-05
    %v681 = vadd.f32 %v617, 1e-05
    %v682 = vadd.f32 %v618, 1e-05
    %v683 = vadd.f32 %v619, 1e-05
    %v684 = vadd.f32 %v620, 1e-05
    %v685 = vadd.f32 %v621, 1e-05
    %v686 = vadd.f32 %v622, 1e-05
    %v687 = vadd.f32 %v623, 1e-05
    %v688 = vadd.f32 %v624, 1e-05
    %v689 = vadd.f32 %v625, 1e-05
    %v690 = vadd.f32 %v626, 1e-05
    %v691 = vadd.f32 %v627, 1e-05
    %v692 = vadd.f32 %v628, 1e-05
    %v693 = vadd.f32 %v629, 1e-05
    %v694 = vadd.f32 %v630, 1e-05
    %v695 = vadd.f32 %v631, 1e-05
    %v696 = vadd.f32 %v632, 1e-05
    %v697 = vadd.f32 %v633, 1e-05
    %v698 = vadd.f32 %v634, 1e-05
    %v699 = vadd.f32 %v635, 1e-05
    %v700 = vadd.f32 %v636, 1e-05
    %v701 = vadd.f32 %v637, 1e-05
    %v702 = vadd.f32 %v638, 1e-05
    %v703 = vadd.f32 %v639, 1e-05
    %v704 = vadd.f32 %v640, 1e-05
    %v705 = vadd.f32 %v641, 1e-05
    %v706 = vadd.f32 %v642, 1e-05
    %v707 = vadd.f32 %v643, 1e-05
    %v708 = vadd.f32 %v644, 1e-05
    %v709 = vadd.f32 %v645, 1e-05
    %v710 = vadd.f32 %v646, 1e-05
    %v711 = vadd.f32 %v647, 1e-05
    %v712 = vadd.f32 %v648, 1e-05
    %v713 = vadd.f32 %v649, 1e-05
    %v714 = vadd.f32 %v650, 1e-05
    %v715 = vadd.f32 %v651, 1e-05
    %v716 = vadd.f32 %v652, 1e-05
    %v717 = vadd.f32 %v653, 1e-05
    %v718 = vadd.f32 %v654, 1e-05
    %v719 = vadd.f32 %v655, 1e-05
    %v720 = vadd.f32 %v656, 1e-05
    %v721 = vadd.f32 %v657, 1e-05
    %v722 = vadd.f32 %v658, 1e-05
    %v723 = vadd.f32 %v659, 1e-05
    %v724 = vadd.f32 %v660, 1e-05
    %v725 = vadd.f32 %v661, 1e-05
    %v726 = vadd.f32 %v662, 1e-05
    %v727 = vadd.f32 %v663, 1e-05
    %v728 = vadd.f32 %v664, 1e-05
    %v729 = vadd.f32 %v665, 1e-05
    %v730 = vadd.f32 %v666, 1e-05
    %v731 = vrsqrt.pop %v667
    %v732 = vrsqrt.pop %v668
    %v733 = vrsqrt.pop %v669
    %v734 = vrsqrt.pop %v670
    %v735 = vrsqrt.pop %v671
    %v736 = vrsqrt.pop %v672
    %v737 = vrsqrt.pop %v673
    %v738 = vrsqrt.pop %v674
    %v739 = vrsqrt.pop %v675
    %v740 = vrsqrt.pop %v676
    %v741 = vrsqrt.pop %v677
    %v742 = vrsqrt.pop %v678
    %v743 = vrsqrt.pop %v679
    %v744 = vrsqrt.pop %v680
    %v745 = vrsqrt.pop %v681
    %v746 = vrsqrt.pop %v682
    %v747 = vrsqrt.pop %v683
    %v748 = vrsqrt.pop %v684
    %v749 = vrsqrt.pop %v685
    %v750 = vrsqrt.pop %v686
    %v751 = vrsqrt.pop %v687
    %v752 = vrsqrt.pop %v688
    %v753 = vrsqrt.pop %v689
    %v754 = vrsqrt.pop %v690
    %v755 = vrsqrt.pop %v691
    %v756 = vrsqrt.pop %v692
    %v757 = vrsqrt.pop %v693
    %v758 = vrsqrt.pop %v694
    %v759 = vrsqrt.pop %v695
    %v760 = vrsqrt.pop %v696
    %v761 = vrsqrt.pop %v697
    %v762 = vrsqrt.pop %v698
    %v763 = vrsqrt.pop %v699
    %v764 = vrsqrt.pop %v700
    %v765 = vrsqrt.pop %v701
    %v766 = vrsqrt.pop %v702
    %v767 = vrsqrt.pop %v703
    %v768 = vrsqrt.pop %v704
    %v769 = vrsqrt.pop %v705
    %v770 = vrsqrt.pop %v706
    %v771 = vrsqrt.pop %v707
    %v772 = vrsqrt.pop %v708
    %v773 = vrsqrt.pop %v709
    %v774 = vrsqrt.pop %v710
    %v775 = vrsqrt.pop %v711
    %v776 = vrsqrt.pop %v712
    %v777 = vrsqrt.pop %v713
    %v778 = vrsqrt.pop %v714
    %v779 = vrsqrt.pop %v715
    %v780 = vrsqrt.pop %v716
    %v781 = vrsqrt.pop %v717
    %v782 = vrsqrt.pop %v718
    %v783 = vrsqrt.pop %v719
    %v784 = vrsqrt.pop %v720
    %v785 = vrsqrt.pop %v721
    %v786 = vrsqrt.pop %v722
    %v787 = vrsqrt.pop %v723
    %v788 = vrsqrt.pop %v724
    %v789 = vrsqrt.pop %v725
    %v790 = vrsqrt.pop %v726
    %v791 = vrsqrt.pop %v727
    %v792 = vrsqrt.pop %v728
    %v793 = vrsqrt.pop %v729
    %v794 = vrsqrt.pop %v730
    %v795 = vmul.f32 %v347, %v731
    %v796 = vmul.f32 %v348, %v732
    %v797 = vmul.f32 %v349, %v733
    %v798 = vmul.f32 %v350, %v734
    %v799 = vmul.f32 %v351, %v735
    %v800 = vmul.f32 %v352, %v736
    %v801 = vmul.f32 %v353, %v737
    %v802 = vmul.f32 %v354, %v738
    %v803 = vmul.f32 %v355, %v739
    %v804 = vmul.f32 %v356, %v740
    %v805 = vmul.f32 %v357, %v741
    %v806 = vmul.f32 %v358, %v742
    %v807 = vmul.f32 %v359, %v743
    %v808 = vmul.f32 %v360, %v744
    %v809 = vmul.f32 %v361, %v745
    %v810 = vmul.f32 %v362, %v746
    %v811 = vmul.f32 %v363, %v747
    %v812 = vmul.f32 %v364, %v748
    %v813 = vmul.f32 %v365, %v749
    %v814 = vmul.f32 %v366, %v750
    %v815 = vmul.f32 %v367, %v751
    %v816 = vmul.f32 %v368, %v752
    %v817 = vmul.f32 %v369, %v753
    %v818 = vmul.f32 %v370, %v754
    %v819 = vmul.f32 %v371, %v755
    %v820 = vmul.f32 %v372, %v756
    %v821 = vmul.f32 %v373, %v757
    %v822 = vmul.f32 %v374, %v758
    %v823 = vmul.f32 %v375, %v759
    %v824 = vmul.f32 %v376, %v760
    %v825 = vmul.f32 %v377, %v761
    %v826 = vmul.f32 %v378, %v762
    %v827 = vmul.f32 %v379, %v763
    %v828 = vmul.f32 %v380, %v764
    %v829 = vmul.f32 %v381, %v765
    %v830 = vmul.f32 %v382, %v766
    %v831 = vmul.f32 %v383, %v767
    %v832 = vmul.f32 %v384, %v768
    %v833 = vmul.f32 %v385, %v769
    %v834 = vmul.f32 %v386, %v770
    %v835 = vmul.f32 %v387, %v771
    %v836 = vmul.f32 %v388, %v772
    %v837 = vmul.f32 %v389, %v773
    %v838 = vmul.f32 %v390, %v774
    %v839 = vmul.f32 %v391, %v775
    %v840 = vmul.f32 %v392, %v776
    %v841 = vmul.f32 %v393, %v777
    %v842 = vmul.f32 %v394, %v778
    %v843 = vmul.f32 %v395, %v779
    %v844 = vmul.f32 %v396, %v780
    %v845 = vmul.f32 %v397, %v781
    %v846 = vmul.f32 %v398, %v782
    %v847 = vmul.f32 %v399, %v783
    %v848 = vmul.f32 %v400, %v784
    %v849 = vmul.f32 %v401, %v785
    %v850 = vmul.f32 %v402, %v786
    %v851 = vmul.f32 %v403, %v787
    %v852 = vmul.f32 %v404, %v788
    %v853 = vmul.f32 %v405, %v789
    %v854 = vmul.f32 %v406, %v790
    %v855 = vmul.f32 %v407, %v791
    %v856 = vmul.f32 %v408, %v792
    %v857 = vmul.f32 %v409, %v793
    %v858 = vmul.f32 %v410, %v794
    %v859 = vpack.c.bf16 %v796, %v795
    %v860 = vpack.c.bf16 %v798, %v797
    %v861 = vpack.c.bf16 %v800, %v799
    %v862 = vpack.c.bf16 %v802, %v801
    %v863 = vpack.c.bf16 %v804, %v803
    %v864 = vpack.c.bf16 %v806, %v805
    %v865 = vpack.c.bf16 %v808, %v807
    %v866 = vpack.c.bf16 %v810, %v809
    %v867 = vpack.c.bf16 %v812, %v811
    %v868 = vpack.c.bf16 %v814, %v813
    %v869 = vpack.c.bf16 %v816, %v815
    %v870 = vpack.c.bf16 %v818, %v817
    %v871 = vpack.c.bf16 %v820, %v819
    %v872 = vpack.c.bf16 %v822, %v821
    %v873 = vpack.c.bf16 %v824, %v823
    %v874 = vpack.c.bf16 %v826, %v825
    %v875 = vpack.c.bf16 %v828, %v827
    %v876 = vpack.c.bf16 %v830, %v829
    %v877 = vpack.c.bf16 %v832, %v831
    %v878 = vpack.c.bf16 %v834, %v833
    %v879 = vpack.c.bf16 %v836, %v835
    %v880 = vpack.c.bf16 %v838, %v837
    %v881 = vpack.c.bf16 %v840, %v839
    %v882 = vpack.c.bf16 %v842, %v841
    %v883 = vpack.c.bf16 %v844, %v843
    %v884 = vpack.c.bf16 %v846, %v845
    %v885 = vpack.c.bf16 %v848, %v847
    %v886 = vpack.c.bf16 %v850, %v849
    %v887 = vpack.c.bf16 %v852, %v851
    %v888 = vpack.c.bf16 %v854, %v853
    %v889 = vpack.c.bf16 %v856, %v855
    %v890 = vpack.c.bf16 %v858, %v857
    %v891 = vld [vmem:[#allocation5] sm:$0xff]
    %v892 = vld [vmem:[#allocation5 + $0x8] sm:$0xff]
    %v893 = vld [vmem:[#allocation5 + $0x10] sm:$0xff]
    %v894 = vld [vmem:[#allocation5 + $0x18] sm:$0xff]
    %v895 = vld [vmem:[#allocation5 + $0x20] sm:$0xff]
    %v896 = vld [vmem:[#allocation5 + $0x28] sm:$0xff]
    %v897 = vld [vmem:[#allocation5 + $0x30] sm:$0xff]
    %v898 = vld [vmem:[#allocation5 + $0x38] sm:$0xff]
    %v899 = vld [vmem:[#allocation5 + $0x40] sm:$0xff]
    %v900 = vld [vmem:[#allocation5 + $0x48] sm:$0xff]
    %v901 = vld [vmem:[#allocation5 + $0x50] sm:$0xff]
    %v902 = vld [vmem:[#allocation5 + $0x58] sm:$0xff]
    %v903 = vld [vmem:[#allocation5 + $0x60] sm:$0xff]
    %v904 = vld [vmem:[#allocation5 + $0x68] sm:$0xff]
    %v905 = vld [vmem:[#allocation5 + $0x70] sm:$0xff]
    %v906 = vld [vmem:[#allocation5 + $0x78] sm:$0xff]
    %v907 = vld [vmem:[#allocation7] sm:$0x3]
    %v909 = vlaneseq
    %v910 = vshrl.u32 %v909, 7
    %v911 = vsub.s32 0, %v910
    %v912 = vrot.slane %v907, %v911
    %v913 = vlaneseq
    %v914 = vshrl.u32 %v913, 7
    %v915 = vsub.s32 1, %v914
    %v916 = vrot.slane %v907, %v915
    %v935 = vunpack.c.l.b16 %v891
    %v936 = vunpack.c.h.b16 %v891
    %v937 = vunpack.c.l.b16 %v892
    %v938 = vunpack.c.h.b16 %v892
    %v939 = vunpack.c.l.b16 %v893
    %v940 = vunpack.c.h.b16 %v893
    %v941 = vunpack.c.l.b16 %v894
    %v942 = vunpack.c.h.b16 %v894
    %v943 = vunpack.c.l.b16 %v895
    %v944 = vunpack.c.h.b16 %v895
    %v945 = vunpack.c.l.b16 %v896
    %v946 = vunpack.c.h.b16 %v896
    %v947 = vunpack.c.l.b16 %v897
    %v948 = vunpack.c.h.b16 %v897
    %v949 = vunpack.c.l.b16 %v898
    %v950 = vunpack.c.h.b16 %v898
    %v951 = vunpack.c.l.b16 %v899
    %v952 = vunpack.c.h.b16 %v899
    %v953 = vunpack.c.l.b16 %v900
    %v954 = vunpack.c.h.b16 %v900
    %v955 = vunpack.c.l.b16 %v901
    %v956 = vunpack.c.h.b16 %v901
    %v957 = vunpack.c.l.b16 %v902
    %v958 = vunpack.c.h.b16 %v902
    %v959 = vunpack.c.l.b16 %v903
    %v960 = vunpack.c.h.b16 %v903
    %v961 = vunpack.c.l.b16 %v904
    %v962 = vunpack.c.h.b16 %v904
    %v963 = vunpack.c.l.b16 %v905
    %v964 = vunpack.c.h.b16 %v905
    %v965 = vunpack.c.l.b16 %v906
    %v966 = vunpack.c.h.b16 %v906
    %v967 = vpack.c.b16 %v937, %v935
    %v968 = vpack.c.b16 %v938, %v936
    %v969 = vpack.c.b16 %v941, %v939
    %v970 = vpack.c.b16 %v942, %v940
    %v971 = vpack.c.b16 %v945, %v943
    %v972 = vpack.c.b16 %v946, %v944
    %v973 = vpack.c.b16 %v949, %v947
    %v974 = vpack.c.b16 %v950, %v948
    %v975 = vpack.c.b16 %v953, %v951
    %v976 = vpack.c.b16 %v954, %v952
    %v977 = vpack.c.b16 %v957, %v955
    %v978 = vpack.c.b16 %v958, %v956
    %v979 = vpack.c.b16 %v961, %v959
    %v980 = vpack.c.b16 %v962, %v960
    %v981 = vpack.c.b16 %v965, %v963
    %v982 = vpack.c.b16 %v966, %v964
    %999 = vmatprep.subr.bf16.mxu0 %v968
    %1000 = vmatpush1.bf16.msra.mxu0 %v967
    %1001 = vmatprep.subr.bf16.mxu0 %v970
    %1002 = vmatpush1.bf16.msra.mxu0 %v969
    %1003 = vmatprep.subr.bf16.mxu0 %v972
    %1004 = vmatpush1.bf16.msra.mxu0 %v971
    %1005 = vmatprep.subr.bf16.mxu0 %v974
    %1006 = vmatpush1.bf16.msra.mxu0 %v973
    %1007 = vmatprep.subr.bf16.mxu0 %v976
    %1008 = vmatpush1.bf16.msra.mxu0 %v975
    %1009 = vmatprep.subr.bf16.mxu0 %v978
    %1010 = vmatpush1.bf16.msra.mxu0 %v977
    %1011 = vmatprep.subr.bf16.mxu0 %v980
    %1012 = vmatpush1.bf16.msra.mxu0 %v979
    %1013 = vmatprep.subr.bf16.mxu0 %v982
    %1014 = vmatpush1.bf16.msra.mxu0 %v981
    %1015 = vmatprep.subr.bf16.mxu0 0
    %1016 = vmatpush1.bf16.msra.mxu0 0
    %1017 = vmatprep.subr.bf16.mxu0 0
    %1018 = vmatpush1.bf16.msra.mxu0 0
    %1019 = vmatprep.subr.bf16.mxu0 0
    %1020 = vmatpush1.bf16.msra.mxu0 0
    %1021 = vmatprep.subr.bf16.mxu0 0
    %1022 = vmatpush1.bf16.msra.mxu0 0
    %1023 = vmatprep.subr.bf16.mxu0 0
    %1024 = vmatpush1.bf16.msra.mxu0 0
    %1025 = vmatprep.subr.bf16.mxu0 0
    %1026 = vmatpush1.bf16.msra.mxu0 0
    %1027 = vmatprep.subr.bf16.mxu0 0
    %1028 = vmatpush1.bf16.msra.mxu0 0
    %1029 = vmatprep.subr.bf16.mxu0 0
    %1030 = vmatpush1.bf16.msra.mxu0 0
    %1031 = vmatprep.mubr.bf16.mxu0 0
    %1032 = vmatmul.mubr.bf16.gmra.mrb[0].mxu0 %v859
    %v1033 = vpop.f32.mrb[0].mxu0
    %v1034 = vadd.f32 %v912, %v1033
    %v1035 = vpop.f32.mrb[0].mxu0
    %v1036 = vadd.f32 %v916, %v1035
    %v1037 = vpop.f32.mrb[0].mxu0
    %v1038 = vadd.f32 %v912, %v1037
    %v1039 = vpop.f32.mrb[0].mxu0
    %v1040 = vadd.f32 %v916, %v1039
    %1041 = vmatprep.mubr.bf16.mxu0 0
    %1042 = vmatmul.mubr.bf16.gmra.mrb[0].mxu0 %v860
    %v1043 = vpop.f32.mrb[0].mxu0
    %v1044 = vadd.f32 %v912, %v1043
    %v1045 = vpop.f32.mrb[0].mxu0
    %v1046 = vadd.f32 %v916, %v1045
    %v1047 = vpop.f32.mrb[0].mxu0
    %v1048 = vadd.f32 %v912, %v1047
    %v1049 = vpop.f32.mrb[0].mxu0
    %v1050 = vadd.f32 %v916, %v1049
    %1051 = vmatprep.mubr.bf16.mxu0 0
    %1052 = vmatmul.mubr.bf16.gmra.mrb[0].mxu0 %v861
    %v1053 = vpop.f32.mrb[0].mxu0
    %v1054 = vadd.f32 %v912, %v1053
    %v1055 = vpop.f32.mrb[0].mxu0
    %v1056 = vadd.f32 %v916, %v1055
    %v1057 = vpop.f32.mrb[0].mxu0
    %v1058 = vadd.f32 %v912, %v1057
    %v1059 = vpop.f32.mrb[0].mxu0
    %v1060 = vadd.f32 %v916, %v1059
    %1061 = vmatprep.mubr.bf16.mxu0 0
    %1062 = vmatmul.mubr.bf16.gmra.mrb[0].mxu0 %v862
    %v1063 = vpop.f32.mrb[0].mxu0
    %v1064 = vadd.f32 %v912, %v1063
    %v1065 = vpop.f32.mrb[0].mxu0
    %v1066 = vadd.f32 %v916, %v1065
    %v1067 = vpop.f32.mrb[0].mxu0
    %v1068 = vadd.f32 %v912, %v1067
    %v1069 = vpop.f32.mrb[0].mxu0
    %v1070 = vadd.f32 %v916, %v1069
    %1071 = vmatprep.mubr.bf16.mxu0 0
    %1072 = vmatmul.mubr.bf16.gmra.mrb[0].mxu0 %v863
    %v1073 = vpop.f32.mrb[0].mxu0
    %v1074 = vadd.f32 %v912, %v1073
    %v1075 = vpop.f32.mrb[0].mxu0
    %v1076 = vadd.f32 %v916, %v1075
    %v1077 = vpop.f32.mrb[0].mxu0
    %v1078 = vadd.f32 %v912, %v1077
    %v1079 = vpop.f32.mrb[0].mxu0
    %v1080 = vadd.f32 %v916, %v1079
    %1081 = vmatprep.mubr.bf16.mxu0 0
    %1082 = vmatmul.mubr.bf16.gmra.mrb[0].mxu0 %v864
    %v1083 = vpop.f32.mrb[0].mxu0
    %v1084 = vadd.f32 %v912, %v1083
    %v1085 = vpop.f32.mrb[0].mxu0
    %v1086 = vadd.f32 %v916, %v1085
    %v1087 = vpop.f32.mrb[0].mxu0
    %v1088 = vadd.f32 %v912, %v1087
    %v1089 = vpop.f32.mrb[0].mxu0
    %v1090 = vadd.f32 %v916, %v1089
    %1091 = vmatprep.mubr.bf16.mxu0 0
    %1092 = vmatmul.mubr.bf16.gmra.mrb[0].mxu0 %v865
    %v1093 = vpop.f32.mrb[0].mxu0
    %v1094 = vadd.f32 %v912, %v1093
    %v1095 = vpop.f32.mrb[0].mxu0
    %v1096 = vadd.f32 %v916, %v1095
    %v1097 = vpop.f32.mrb[0].mxu0
    %v1098 = vadd.f32 %v912, %v1097
    %v1099 = vpop.f32.mrb[0].mxu0
    %v1100 = vadd.f32 %v916, %v1099
    %1101 = vmatprep.mubr.bf16.mxu0 0
    %1102 = vmatmul.mubr.bf16.gmra.mrb[0].mxu0 %v866
    %v1103 = vpop.f32.mrb[0].mxu0
    %v1104 = vadd.f32 %v912, %v1103
    %v1105 = vpop.f32.mrb[0].mxu0
    %v1106 = vadd.f32 %v916, %v1105
    %v1107 = vpop.f32.mrb[0].mxu0
    %v1108 = vadd.f32 %v912, %v1107
    %v1109 = vpop.f32.mrb[0].mxu0
    %v1110 = vadd.f32 %v916, %v1109
    %1111 = vmatprep.mubr.bf16.mxu0 0
    %1112 = vmatmul.mubr.bf16.gmra.mrb[0].mxu0 %v867
    %v1113 = vpop.f32.mrb[0].mxu0
    %v1114 = vadd.f32 %v912, %v1113
    %v1115 = vpop.f32.mrb[0].mxu0
    %v1116 = vadd.f32 %v916, %v1115
    %v1117 = vpop.f32.mrb[0].mxu0
    %v1118 = vadd.f32 %v912, %v1117
    %v1119 = vpop.f32.mrb[0].mxu0
    %v1120 = vadd.f32 %v916, %v1119
    %1121 = vmatprep.mubr.bf16.mxu0 0
    %1122 = vmatmul.mubr.bf16.gmra.mrb[0].mxu0 %v868
    %v1123 = vpop.f32.mrb[0].mxu0
    %v1124 = vadd.f32 %v912, %v1123
    %v1125 = vpop.f32.mrb[0].mxu0
    %v1126 = vadd.f32 %v916, %v1125
    %v1127 = vpop.f32.mrb[0].mxu0
    %v1128 = vadd.f32 %v912, %v1127
    %v1129 = vpop.f32.mrb[0].mxu0
    %v1130 = vadd.f32 %v916, %v1129
    %1131 = vmatprep.mubr.bf16.mxu0 0
    %1132 = vmatmul.mubr.bf16.gmra.mrb[0].mxu0 %v869
    %v1133 = vpop.f32.mrb[0].mxu0
    %v1134 = vadd.f32 %v912, %v1133
    %v1135 = vpop.f32.mrb[0].mxu0
    %v1136 = vadd.f32 %v916, %v1135
    %v1137 = vpop.f32.mrb[0].mxu0
    %v1138 = vadd.f32 %v912, %v1137
    %v1139 = vpop.f32.mrb[0].mxu0
    %v1140 = vadd.f32 %v916, %v1139
    %1141 = vmatprep.mubr.bf16.mxu0 0
    %1142 = vmatmul.mubr.bf16.gmra.mrb[0].mxu0 %v870
    %v1143 = vpop.f32.mrb[0].mxu0
    %v1144 = vadd.f32 %v912, %v1143
    %v1145 = vpop.f32.mrb[0].mxu0
    %v1146 = vadd.f32 %v916, %v1145
    %v1147 = vpop.f32.mrb[0].mxu0
    %v1148 = vadd.f32 %v912, %v1147
    %v1149 = vpop.f32.mrb[0].mxu0
    %v1150 = vadd.f32 %v916, %v1149
    %1151 = vmatprep.mubr.bf16.mxu0 0
    %1152 = vmatmul.mubr.bf16.gmra.mrb[0].mxu0 %v871
    %v1153 = vpop.f32.mrb[0].mxu0
    %v1154 = vadd.f32 %v912, %v1153
    %v1155 = vpop.f32.mrb[0].mxu0
    %v1156 = vadd.f32 %v916, %v1155
    %v1157 = vpop.f32.mrb[0].mxu0
    %v1158 = vadd.f32 %v912, %v1157
    %v1159 = vpop.f32.mrb[0].mxu0
    %v1160 = vadd.f32 %v916, %v1159
    %1161 = vmatprep.mubr.bf16.mxu0 0
    %1162 = vmatmul.mubr.bf16.gmra.mrb[0].mxu0 %v872
    %v1163 = vpop.f32.mrb[0].mxu0
    %v1164 = vadd.f32 %v912, %v1163
    %v1165 = vpop.f32.mrb[0].mxu0
    %v1166 = vadd.f32 %v916, %v1165
    %v1167 = vpop.f32.mrb[0].mxu0
    %v1168 = vadd.f32 %v912, %v1167
    %v1169 = vpop.f32.mrb[0].mxu0
    %v1170 = vadd.f32 %v916, %v1169
    %1171 = vmatprep.mubr.bf16.mxu0 0
    %1172 = vmatmul.mubr.bf16.gmra.mrb[0].mxu0 %v873
    %v1173 = vpop.f32.mrb[0].mxu0
    %v1174 = vadd.f32 %v912, %v1173
    %v1175 = vpop.f32.mrb[0].mxu0
    %v1176 = vadd.f32 %v916, %v1175
    %v1177 = vpop.f32.mrb[0].mxu0
    %v1178 = vadd.f32 %v912, %v1177
    %v1179 = vpop.f32.mrb[0].mxu0
    %v1180 = vadd.f32 %v916, %v1179
    %1181 = vmatprep.mubr.bf16.mxu0 0
    %1182 = vmatmul.mubr.bf16.gmra.mrb[0].mxu0 %v874
    %v1183 = vpop.f32.mrb[0].mxu0
    %v1184 = vadd.f32 %v912, %v1183
    %v1185 = vpop.f32.mrb[0].mxu0
    %v1186 = vadd.f32 %v916, %v1185
    %v1187 = vpop.f32.mrb[0].mxu0
    %v1188 = vadd.f32 %v912, %v1187
    %v1189 = vpop.f32.mrb[0].mxu0
    %v1190 = vadd.f32 %v916, %v1189
    %1191 = vmatprep.mubr.bf16.mxu0 0
    %1192 = vmatmul.mubr.bf16.gmra.mrb[0].mxu0 %v875
    %v1193 = vpop.f32.mrb[0].mxu0
    %v1194 = vadd.f32 %v912, %v1193
    %v1195 = vpop.f32.mrb[0].mxu0
    %v1196 = vadd.f32 %v916, %v1195
    %v1197 = vpop.f32.mrb[0].mxu0
    %v1198 = vadd.f32 %v912, %v1197
    %v1199 = vpop.f32.mrb[0].mxu0
    %v1200 = vadd.f32 %v916, %v1199
    %1201 = vmatprep.mubr.bf16.mxu0 0
    %1202 = vmatmul.mubr.bf16.gmra.mrb[0].mxu0 %v876
    %v1203 = vpop.f32.mrb[0].mxu0
    %v1204 = vadd.f32 %v912, %v1203
    %v1205 = vpop.f32.mrb[0].mxu0
    %v1206 = vadd.f32 %v916, %v1205
    %v1207 = vpop.f32.mrb[0].mxu0
    %v1208 = vadd.f32 %v912, %v1207
    %v1209 = vpop.f32.mrb[0].mxu0
    %v1210 = vadd.f32 %v916, %v1209
    %1211 = vmatprep.mubr.bf16.mxu0 0
    %1212 = vmatmul.mubr.bf16.gmra.mrb[0].mxu0 %v877
    %v1213 = vpop.f32.mrb[0].mxu0
    %v1214 = vadd.f32 %v912, %v1213
    %v1215 = vpop.f32.mrb[0].mxu0
    %v1216 = vadd.f32 %v916, %v1215
    %v1217 = vpop.f32.mrb[0].mxu0
    %v1218 = vadd.f32 %v912, %v1217
    %v1219 = vpop.f32.mrb[0].mxu0
    %v1220 = vadd.f32 %v916, %v1219
    %1221 = vmatprep.mubr.bf16.mxu0 0
    %1222 = vmatmul.mubr.bf16.gmra.mrb[0].mxu0 %v878
    %v1223 = vpop.f32.mrb[0].mxu0
    %v1224 = vadd.f32 %v912, %v1223
    %v1225 = vpop.f32.mrb[0].mxu0
    %v1226 = vadd.f32 %v916, %v1225
    %v1227 = vpop.f32.mrb[0].mxu0
    %v1228 = vadd.f32 %v912, %v1227
    %v1229 = vpop.f32.mrb[0].mxu0
    %v1230 = vadd.f32 %v916, %v1229
    %1231 = vmatprep.mubr.bf16.mxu0 0
    %1232 = vmatmul.mubr.bf16.gmra.mrb[0].mxu0 %v879
    %v1233 = vpop.f32.mrb[0].mxu0
    %v1234 = vadd.f32 %v912, %v1233
    %v1235 = vpop.f32.mrb[0].mxu0
    %v1236 = vadd.f32 %v916, %v1235
    %v1237 = vpop.f32.mrb[0].mxu0
    %v1238 = vadd.f32 %v912, %v1237
    %v1239 = vpop.f32.mrb[0].mxu0
    %v1240 = vadd.f32 %v916, %v1239
    %1241 = vmatprep.mubr.bf16.mxu0 0
    %1242 = vmatmul.mubr.bf16.gmra.mrb[0].mxu0 %v880
    %v1243 = vpop.f32.mrb[0].mxu0
    %v1244 = vadd.f32 %v912, %v1243
    %v1245 = vpop.f32.mrb[0].mxu0
    %v1246 = vadd.f32 %v916, %v1245
    %v1247 = vpop.f32.mrb[0].mxu0
    %v1248 = vadd.f32 %v912, %v1247
    %v1249 = vpop.f32.mrb[0].mxu0
    %v1250 = vadd.f32 %v916, %v1249
    %1251 = vmatprep.mubr.bf16.mxu0 0
    %1252 = vmatmul.mubr.bf16.gmra.mrb[0].mxu0 %v881
    %v1253 = vpop.f32.mrb[0].mxu0
    %v1254 = vadd.f32 %v912, %v1253
    %v1255 = vpop.f32.mrb[0].mxu0
    %v1256 = vadd.f32 %v916, %v1255
    %v1257 = vpop.f32.mrb[0].mxu0
    %v1258 = vadd.f32 %v912, %v1257
    %v1259 = vpop.f32.mrb[0].mxu0
    %v1260 = vadd.f32 %v916, %v1259
    %1261 = vmatprep.mubr.bf16.mxu0 0
    %1262 = vmatmul.mubr.bf16.gmra.mrb[0].mxu0 %v882
    %v1263 = vpop.f32.mrb[0].mxu0
    %v1264 = vadd.f32 %v912, %v1263
    %v1265 = vpop.f32.mrb[0].mxu0
    %v1266 = vadd.f32 %v916, %v1265
    %v1267 = vpop.f32.mrb[0].mxu0
    %v1268 = vadd.f32 %v912, %v1267
    %v1269 = vpop.f32.mrb[0].mxu0
    %v1270 = vadd.f32 %v916, %v1269
    %1271 = vmatprep.mubr.bf16.mxu0 0
    %1272 = vmatmul.mubr.bf16.gmra.mrb[0].mxu0 %v883
    %v1273 = vpop.f32.mrb[0].mxu0
    %v1274 = vadd.f32 %v912, %v1273
    %v1275 = vpop.f32.mrb[0].mxu0
    %v1276 = vadd.f32 %v916, %v1275
    %v1277 = vpop.f32.mrb[0].mxu0
    %v1278 = vadd.f32 %v912, %v1277
    %v1279 = vpop.f32.mrb[0].mxu0
    %v1280 = vadd.f32 %v916, %v1279
    %1281 = vmatprep.mubr.bf16.mxu0 0
    %1282 = vmatmul.mubr.bf16.gmra.mrb[0].mxu0 %v884
    %v1283 = vpop.f32.mrb[0].mxu0
    %v1284 = vadd.f32 %v912, %v1283
    %v1285 = vpop.f32.mrb[0].mxu0
    %v1286 = vadd.f32 %v916, %v1285
    %v1287 = vpop.f32.mrb[0].mxu0
    %v1288 = vadd.f32 %v912, %v1287
    %v1289 = vpop.f32.mrb[0].mxu0
    %v1290 = vadd.f32 %v916, %v1289
    %1291 = vmatprep.mubr.bf16.mxu0 0
    %1292 = vmatmul.mubr.bf16.gmra.mrb[0].mxu0 %v885
    %v1293 = vpop.f32.mrb[0].mxu0
    %v1294 = vadd.f32 %v912, %v1293
    %v1295 = vpop.f32.mrb[0].mxu0
    %v1296 = vadd.f32 %v916, %v1295
    %v1297 = vpop.f32.mrb[0].mxu0
    %v1298 = vadd.f32 %v912, %v1297
    %v1299 = vpop.f32.mrb[0].mxu0
    %v1300 = vadd.f32 %v916, %v1299
    %1301 = vmatprep.mubr.bf16.mxu0 0
    %1302 = vmatmul.mubr.bf16.gmra.mrb[0].mxu0 %v886
    %v1303 = vpop.f32.mrb[0].mxu0
    %v1304 = vadd.f32 %v912, %v1303
    %v1305 = vpop.f32.mrb[0].mxu0
    %v1306 = vadd.f32 %v916, %v1305
    %v1307 = vpop.f32.mrb[0].mxu0
    %v1308 = vadd.f32 %v912, %v1307
    %v1309 = vpop.f32.mrb[0].mxu0
    %v1310 = vadd.f32 %v916, %v1309
    %1311 = vmatprep.mubr.bf16.mxu0 0
    %1312 = vmatmul.mubr.bf16.gmra.mrb[0].mxu0 %v887
    %v1313 = vpop.f32.mrb[0].mxu0
    %v1314 = vadd.f32 %v912, %v1313
    %v1315 = vpop.f32.mrb[0].mxu0
    %v1316 = vadd.f32 %v916, %v1315
    %v1317 = vpop.f32.mrb[0].mxu0
    %v1318 = vadd.f32 %v912, %v1317
    %v1319 = vpop.f32.mrb[0].mxu0
    %v1320 = vadd.f32 %v916, %v1319
    %1321 = vmatprep.mubr.bf16.mxu0 0
    %1322 = vmatmul.mubr.bf16.gmra.mrb[0].mxu0 %v888
    %v1323 = vpop.f32.mrb[0].mxu0
    %v1324 = vadd.f32 %v912, %v1323
    %v1325 = vpop.f32.mrb[0].mxu0
    %v1326 = vadd.f32 %v916, %v1325
    %v1327 = vpop.f32.mrb[0].mxu0
    %v1328 = vadd.f32 %v912, %v1327
    %v1329 = vpop.f32.mrb[0].mxu0
    %v1330 = vadd.f32 %v916, %v1329
    %1331 = vmatprep.mubr.bf16.mxu0 0
    %1332 = vmatmul.mubr.bf16.gmra.mrb[0].mxu0 %v889
    %v1333 = vpop.f32.mrb[0].mxu0
    %v1334 = vadd.f32 %v912, %v1333
    %v1335 = vpop.f32.mrb[0].mxu0
    %v1336 = vadd.f32 %v916, %v1335
    %v1337 = vpop.f32.mrb[0].mxu0
    %v1338 = vadd.f32 %v912, %v1337
    %v1339 = vpop.f32.mrb[0].mxu0
    %v1340 = vadd.f32 %v916, %v1339
    %1341 = vmatprep.mubr.bf16.mxu0 0
    %1342 = vmatmul.mubr.bf16.gmra.mrb[0].mxu0 %v890
    %v1343 = vpop.f32.mrb[0].mxu0
    %v1344 = vadd.f32 %v912, %v1343
    %v1345 = vpop.f32.mrb[0].mxu0
    %v1346 = vadd.f32 %v916, %v1345
    %v1347 = vpop.f32.mrb[0].mxu0
    %v1348 = vadd.f32 %v912, %v1347
    %v1349 = vpop.f32.mrb[0].mxu0
    %v1350 = vadd.f32 %v916, %v1349
    %1351 = vdwg.mxu0
    %v1352 = vpack.c.bf16 %v1038, %v1034
    %v1353 = vpack.c.bf16 %v1040, %v1036
    %v1354 = vpack.c.bf16 %v1048, %v1044
    %v1355 = vpack.c.bf16 %v1050, %v1046
    %v1356 = vpack.c.bf16 %v1058, %v1054
    %v1357 = vpack.c.bf16 %v1060, %v1056
    %v1358 = vpack.c.bf16 %v1068, %v1064
    %v1359 = vpack.c.bf16 %v1070, %v1066
    %v1360 = vpack.c.bf16 %v1078, %v1074
    %v1361 = vpack.c.bf16 %v1080, %v1076
    %v1362 = vpack.c.bf16 %v1088, %v1084
    %v1363 = vpack.c.bf16 %v1090, %v1086
    %v1364 = vpack.c.bf16 %v1098, %v1094
    %v1365 = vpack.c.bf16 %v1100, %v1096
    %v1366 = vpack.c.bf16 %v1108, %v1104
    %v1367 = vpack.c.bf16 %v1110, %v1106
    %v1368 = vpack.c.bf16 %v1118, %v1114
    %v1369 = vpack.c.bf16 %v1120, %v1116
    %v1370 = vpack.c.bf16 %v1128, %v1124
    %v1371 = vpack.c.bf16 %v1130, %v1126
    %v1372 = vpack.c.bf16 %v1138, %v1134
    %v1373 = vpack.c.bf16 %v1140, %v1136
    %v1374 = vpack.c.bf16 %v1148, %v1144
    %v1375 = vpack.c.bf16 %v1150, %v1146
    %v1376 = vpack.c.bf16 %v1158, %v1154
    %v1377 = vpack.c.bf16 %v1160, %v1156
    %v1378 = vpack.c.bf16 %v1168, %v1164
    %v1379 = vpack.c.bf16 %v1170, %v1166
    %v1380 = vpack.c.bf16 %v1178, %v1174
    %v1381 = vpack.c.bf16 %v1180, %v1176
    %v1382 = vpack.c.bf16 %v1188, %v1184
    %v1383 = vpack.c.bf16 %v1190, %v1186
    %v1384 = vpack.c.bf16 %v1198, %v1194
    %v1385 = vpack.c.bf16 %v1200, %v1196
    %v1386 = vpack.c.bf16 %v1208, %v1204
    %v1387 = vpack.c.bf16 %v1210, %v1206
    %v1388 = vpack.c.bf16 %v1218, %v1214
    %v1389 = vpack.c.bf16 %v1220, %v1216
    %v1390 = vpack.c.bf16 %v1228, %v1224
    %v1391 = vpack.c.bf16 %v1230, %v1226
    %v1392 = vpack.c.bf16 %v1238, %v1234
    %v1393 = vpack.c.bf16 %v1240, %v1236
    %v1394 = vpack.c.bf16 %v1248, %v1244
    %v1395 = vpack.c.bf16 %v1250, %v1246
    %v1396 = vpack.c.bf16 %v1258, %v1254
    %v1397 = vpack.c.bf16 %v1260, %v1256
    %v1398 = vpack.c.bf16 %v1268, %v1264
    %v1399 = vpack.c.bf16 %v1270, %v1266
    %v1400 = vpack.c.bf16 %v1278, %v1274
    %v1401 = vpack.c.bf16 %v1280, %v1276
    %v1402 = vpack.c.bf16 %v1288, %v1284
    %v1403 = vpack.c.bf16 %v1290, %v1286
    %v1404 = vpack.c.bf16 %v1298, %v1294
    %v1405 = vpack.c.bf16 %v1300, %v1296
    %v1406 = vpack.c.bf16 %v1308, %v1304
    %v1407 = vpack.c.bf16 %v1310, %v1306
    %v1408 = vpack.c.bf16 %v1318, %v1314
    %v1409 = vpack.c.bf16 %v1320, %v1316
    %v1410 = vpack.c.bf16 %v1328, %v1324
    %v1411 = vpack.c.bf16 %v1330, %v1326
    %v1412 = vpack.c.bf16 %v1338, %v1334
    %v1413 = vpack.c.bf16 %v1340, %v1336
    %v1414 = vpack.c.bf16 %v1348, %v1344
    %v1415 = vpack.c.bf16 %v1350, %v1346
    %v1416 = vmul.bf16 %v1352, %v1352
    %v1417 = vmul.bf16 %v1353, %v1353
    %v1418 = vmul.bf16 %v1354, %v1354
    %v1419 = vmul.bf16 %v1355, %v1355
    %v1420 = vmul.bf16 %v1356, %v1356
    %v1421 = vmul.bf16 %v1357, %v1357
    %v1422 = vmul.bf16 %v1358, %v1358
    %v1423 = vmul.bf16 %v1359, %v1359
    %v1424 = vmul.bf16 %v1360, %v1360
    %v1425 = vmul.bf16 %v1361, %v1361
    %v1426 = vmul.bf16 %v1362, %v1362
    %v1427 = vmul.bf16 %v1363, %v1363
    %v1428 = vmul.bf16 %v1364, %v1364
    %v1429 = vmul.bf16 %v1365, %v1365
    %v1430 = vmul.bf16 %v1366, %v1366
    %v1431 = vmul.bf16 %v1367, %v1367
    %v1432 = vmul.bf16 %v1368, %v1368
    %v1433 = vmul.bf16 %v1369, %v1369
    %v1434 = vmul.bf16 %v1370, %v1370
    %v1435 = vmul.bf16 %v1371, %v1371
    %v1436 = vmul.bf16 %v1372, %v1372
    %v1437 = vmul.bf16 %v1373, %v1373
    %v1438 = vmul.bf16 %v1374, %v1374
    %v1439 = vmul.bf16 %v1375, %v1375
    %v1440 = vmul.bf16 %v1376, %v1376
    %v1441 = vmul.bf16 %v1377, %v1377
    %v1442 = vmul.bf16 %v1378, %v1378
    %v1443 = vmul.bf16 %v1379, %v1379
    %v1444 = vmul.bf16 %v1380, %v1380
    %v1445 = vmul.bf16 %v1381, %v1381
    %v1446 = vmul.bf16 %v1382, %v1382
    %v1447 = vmul.bf16 %v1383, %v1383
    %v1448 = vmul.bf16 %v1384, %v1384
    %v1449 = vmul.bf16 %v1385, %v1385
    %v1450 = vmul.bf16 %v1386, %v1386
    %v1451 = vmul.bf16 %v1387, %v1387
    %v1452 = vmul.bf16 %v1388, %v1388
    %v1453 = vmul.bf16 %v1389, %v1389
    %v1454 = vmul.bf16 %v1390, %v1390
    %v1455 = vmul.bf16 %v1391, %v1391
    %v1456 = vmul.bf16 %v1392, %v1392
    %v1457 = vmul.bf16 %v1393, %v1393
    %v1458 = vmul.bf16 %v1394, %v1394
    %v1459 = vmul.bf16 %v1395, %v1395
    %v1460 = vmul.bf16 %v1396, %v1396
    %v1461 = vmul.bf16 %v1397, %v1397
    %v1462 = vmul.bf16 %v1398, %v1398
    %v1463 = vmul.bf16 %v1399, %v1399
    %v1464 = vmul.bf16 %v1400, %v1400
    %v1465 = vmul.bf16 %v1401, %v1401
    %v1466 = vmul.bf16 %v1402, %v1402
    %v1467 = vmul.bf16 %v1403, %v1403
    %v1468 = vmul.bf16 %v1404, %v1404
    %v1469 = vmul.bf16 %v1405, %v1405
    %v1470 = vmul.bf16 %v1406, %v1406
    %v1471 = vmul.bf16 %v1407, %v1407
    %v1472 = vmul.bf16 %v1408, %v1408
    %v1473 = vmul.bf16 %v1409, %v1409
    %v1474 = vmul.bf16 %v1410, %v1410
    %v1475 = vmul.bf16 %v1411, %v1411
    %v1476 = vmul.bf16 %v1412, %v1412
    %v1477 = vmul.bf16 %v1413, %v1413
    %v1478 = vmul.bf16 %v1414, %v1414
    %v1479 = vmul.bf16 %v1415, %v1415
    %v1480 = vmul.bf16 %v1352, %v1416
    %v1481 = vmul.bf16 %v1353, %v1417
    %v1482 = vmul.bf16 %v1354, %v1418
    %v1483 = vmul.bf16 %v1355, %v1419
    %v1484 = vmul.bf16 %v1356, %v1420
    %v1485 = vmul.bf16 %v1357, %v1421
    %v1486 = vmul.bf16 %v1358, %v1422
    %v1487 = vmul.bf16 %v1359, %v1423
    %v1488 = vmul.bf16 %v1360, %v1424
    %v1489 = vmul.bf16 %v1361, %v1425
    %v1490 = vmul.bf16 %v1362, %v1426
    %v1491 = vmul.bf16 %v1363, %v1427
    %v1492 = vmul.bf16 %v1364, %v1428
    %v1493 = vmul.bf16 %v1365, %v1429
    %v1494 = vmul.bf16 %v1366, %v1430
    %v1495 = vmul.bf16 %v1367, %v1431
    %v1496 = vmul.bf16 %v1368, %v1432
    %v1497 = vmul.bf16 %v1369, %v1433
    %v1498 = vmul.bf16 %v1370, %v1434
    %v1499 = vmul.bf16 %v1371, %v1435
    %v1500 = vmul.bf16 %v1372, %v1436
    %v1501 = vmul.bf16 %v1373, %v1437
    %v1502 = vmul.bf16 %v1374, %v1438
    %v1503 = vmul.bf16 %v1375, %v1439
    %v1504 = vmul.bf16 %v1376, %v1440
    %v1505 = vmul.bf16 %v1377, %v1441
    %v1506 = vmul.bf16 %v1378, %v1442
    %v1507 = vmul.bf16 %v1379, %v1443
    %v1508 = vmul.bf16 %v1380, %v1444
    %v1509 = vmul.bf16 %v1381, %v1445
    %v1510 = vmul.bf16 %v1382, %v1446
    %v1511 = vmul.bf16 %v1383, %v1447
    %v1512 = vmul.bf16 %v1384, %v1448
    %v1513 = vmul.bf16 %v1385, %v1449
    %v1514 = vmul.bf16 %v1386, %v1450
    %v1515 = vmul.bf16 %v1387, %v1451
    %v1516 = vmul.bf16 %v1388, %v1452
    %v1517 = vmul.bf16 %v1389, %v1453
    %v1518 = vmul.bf16 %v1390, %v1454
    %v1519 = vmul.bf16 %v1391, %v1455
    %v1520 = vmul.bf16 %v1392, %v1456
    %v1521 = vmul.bf16 %v1393, %v1457
    %v1522 = vmul.bf16 %v1394, %v1458
    %v1523 = vmul.bf16 %v1395, %v1459
    %v1524 = vmul.bf16 %v1396, %v1460
    %v1525 = vmul.bf16 %v1397, %v1461
    %v1526 = vmul.bf16 %v1398, %v1462
    %v1527 = vmul.bf16 %v1399, %v1463
    %v1528 = vmul.bf16 %v1400, %v1464
    %v1529 = vmul.bf16 %v1401, %v1465
    %v1530 = vmul.bf16 %v1402, %v1466
    %v1531 = vmul.bf16 %v1403, %v1467
    %v1532 = vmul.bf16 %v1404, %v1468
    %v1533 = vmul.bf16 %v1405, %v1469
    %v1534 = vmul.bf16 %v1406, %v1470
    %v1535 = vmul.bf16 %v1407, %v1471
    %v1536 = vmul.bf16 %v1408, %v1472
    %v1537 = vmul.bf16 %v1409, %v1473
    %v1538 = vmul.bf16 %v1410, %v1474
    %v1539 = vmul.bf16 %v1411, %v1475
    %v1540 = vmul.bf16 %v1412, %v1476
    %v1541 = vmul.bf16 %v1413, %v1477
    %v1542 = vmul.bf16 %v1414, %v1478
    %v1543 = vmul.bf16 %v1415, %v1479
    %v1544 = vmul.bf16 %v1480, 1027030327
    %v1545 = vmul.bf16 %v1481, 1027030327
    %v1546 = vmul.bf16 %v1482, 1027030327
    %v1547 = vmul.bf16 %v1483, 1027030327
    %v1548 = vmul.bf16 %v1484, 1027030327
    %v1549 = vmul.bf16 %v1485, 1027030327
    %v1550 = vmul.bf16 %v1486, 1027030327
    %v1551 = vmul.bf16 %v1487, 1027030327
    %v1552 = vmul.bf16 %v1488, 1027030327
    %v1553 = vmul.bf16 %v1489, 1027030327
    %v1554 = vmul.bf16 %v1490, 1027030327
    %v1555 = vmul.bf16 %v1491, 1027030327
    %v1556 = vmul.bf16 %v1492, 1027030327
    %v1557 = vmul.bf16 %v1493, 1027030327
    %v1558 = vmul.bf16 %v1494, 1027030327
    %v1559 = vmul.bf16 %v1495, 1027030327
    %v1560 = vmul.bf16 %v1496, 1027030327
    %v1561 = vmul.bf16 %v1497, 1027030327
    %v1562 = vmul.bf16 %v1498, 1027030327
    %v1563 = vmul.bf16 %v1499, 1027030327
    %v1564 = vmul.bf16 %v1500, 1027030327
    %v1565 = vmul.bf16 %v1501, 1027030327
    %v1566 = vmul.bf16 %v1502, 1027030327
    %v1567 = vmul.bf16 %v1503, 1027030327
    %v1568 = vmul.bf16 %v1504, 1027030327
    %v1569 = vmul.bf16 %v1505, 1027030327
    %v1570 = vmul.bf16 %v1506, 1027030327
    %v1571 = vmul.bf16 %v1507, 1027030327
    %v1572 = vmul.bf16 %v1508, 1027030327
    %v1573 = vmul.bf16 %v1509, 1027030327
    %v1574 = vmul.bf16 %v1510, 1027030327
    %v1575 = vmul.bf16 %v1511, 1027030327
    %v1576 = vmul.bf16 %v1512, 1027030327
    %v1577 = vmul.bf16 %v1513, 1027030327
    %v1578 = vmul.bf16 %v1514, 1027030327
    %v1579 = vmul.bf16 %v1515, 1027030327
    %v1580 = vmul.bf16 %v1516, 1027030327
    %v1581 = vmul.bf16 %v1517, 1027030327
    %v1582 = vmul.bf16 %v1518, 1027030327
    %v1583 = vmul.bf16 %v1519, 1027030327
    %v1584 = vmul.bf16 %v1520, 1027030327
    %v1585 = vmul.bf16 %v1521, 1027030327
    %v1586 = vmul.bf16 %v1522, 1027030327
    %v1587 = vmul.bf16 %v1523, 1027030327
    %v1588 = vmul.bf16 %v1524, 1027030327
    %v1589 = vmul.bf16 %v1525, 1027030327
    %v1590 = vmul.bf16 %v1526, 1027030327
    %v1591 = vmul.bf16 %v1527, 1027030327
    %v1592 = vmul.bf16 %v1528, 1027030327
    %v1593 = vmul.bf16 %v1529, 1027030327
    %v1594 = vmul.bf16 %v1530, 1027030327
    %v1595 = vmul.bf16 %v1531, 1027030327
    %v1596 = vmul.bf16 %v1532, 1027030327
    %v1597 = vmul.bf16 %v1533, 1027030327
    %v1598 = vmul.bf16 %v1534, 1027030327
    %v1599 = vmul.bf16 %v1535, 1027030327
    %v1600 = vmul.bf16 %v1536, 1027030327
    %v1601 = vmul.bf16 %v1537, 1027030327
    %v1602 = vmul.bf16 %v1538, 1027030327
    %v1603 = vmul.bf16 %v1539, 1027030327
    %v1604 = vmul.bf16 %v1540, 1027030327
    %v1605 = vmul.bf16 %v1541, 1027030327
    %v1606 = vmul.bf16 %v1542, 1027030327
    %v1607 = vmul.bf16 %v1543, 1027030327
    %v1608 = vadd.bf16 %v1352, %v1544
    %v1609 = vadd.bf16 %v1353, %v1545
    %v1610 = vadd.bf16 %v1354, %v1546
    %v1611 = vadd.bf16 %v1355, %v1547
    %v1612 = vadd.bf16 %v1356, %v1548
    %v1613 = vadd.bf16 %v1357, %v1549
    %v1614 = vadd.bf16 %v1358, %v1550
    %v1615 = vadd.bf16 %v1359, %v1551
    %v1616 = vadd.bf16 %v1360, %v1552
    %v1617 = vadd.bf16 %v1361, %v1553
    %v1618 = vadd.bf16 %v1362, %v1554
    %v1619 = vadd.bf16 %v1363, %v1555
    %v1620 = vadd.bf16 %v1364, %v1556
    %v1621 = vadd.bf16 %v1365, %v1557
    %v1622 = vadd.bf16 %v1366, %v1558
    %v1623 = vadd.bf16 %v1367, %v1559
    %v1624 = vadd.bf16 %v1368, %v1560
    %v1625 = vadd.bf16 %v1369, %v1561
    %v1626 = vadd.bf16 %v1370, %v1562
    %v1627 = vadd.bf16 %v1371, %v1563
    %v1628 = vadd.bf16 %v1372, %v1564
    %v1629 = vadd.bf16 %v1373, %v1565
    %v1630 = vadd.bf16 %v1374, %v1566
    %v1631 = vadd.bf16 %v1375, %v1567
    %v1632 = vadd.bf16 %v1376, %v1568
    %v1633 = vadd.bf16 %v1377, %v1569
    %v1634 = vadd.bf16 %v1378, %v1570
    %v1635 = vadd.bf16 %v1379, %v1571
    %v1636 = vadd.bf16 %v1380, %v1572
    %v1637 = vadd.bf16 %v1381, %v1573
    %v1638 = vadd.bf16 %v1382, %v1574
    %v1639 = vadd.bf16 %v1383, %v1575
    %v1640 = vadd.bf16 %v1384, %v1576
    %v1641 = vadd.bf16 %v1385, %v1577
    %v1642 = vadd.bf16 %v1386, %v1578
    %v1643 = vadd.bf16 %v1387, %v1579
    %v1644 = vadd.bf16 %v1388, %v1580
    %v1645 = vadd.bf16 %v1389, %v1581
    %v1646 = vadd.bf16 %v1390, %v1582
    %v1647 = vadd.bf16 %v1391, %v1583
    %v1648 = vadd.bf16 %v1392, %v1584
    %v1649 = vadd.bf16 %v1393, %v1585
    %v1650 = vadd.bf16 %v1394, %v1586
    %v1651 = vadd.bf16 %v1395, %v1587
    %v1652 = vadd.bf16 %v1396, %v1588
    %v1653 = vadd.bf16 %v1397, %v1589
    %v1654 = vadd.bf16 %v1398, %v1590
    %v1655 = vadd.bf16 %v1399, %v1591
    %v1656 = vadd.bf16 %v1400, %v1592
    %v1657 = vadd.bf16 %v1401, %v1593
    %v1658 = vadd.bf16 %v1402, %v1594
    %v1659 = vadd.bf16 %v1403, %v1595
    %v1660 = vadd.bf16 %v1404, %v1596
    %v1661 = vadd.bf16 %v1405, %v1597
    %v1662 = vadd.bf16 %v1406, %v1598
    %v1663 = vadd.bf16 %v1407, %v1599
    %v1664 = vadd.bf16 %v1408, %v1600
    %v1665 = vadd.bf16 %v1409, %v1601
    %v1666 = vadd.bf16 %v1410, %v1602
    %v1667 = vadd.bf16 %v1411, %v1603
    %v1668 = vadd.bf16 %v1412, %v1604
    %v1669 = vadd.bf16 %v1413, %v1605
    %v1670 = vadd.bf16 %v1414, %v1606
    %v1671 = vadd.bf16 %v1415, %v1607
    %v1672 = vmul.bf16 %v1608, 1061961548
    %v1673 = vmul.bf16 %v1609, 1061961548
    %v1674 = vmul.bf16 %v1610, 1061961548
    %v1675 = vmul.bf16 %v1611, 1061961548
    %v1676 = vmul.bf16 %v1612, 1061961548
    %v1677 = vmul.bf16 %v1613, 1061961548
    %v1678 = vmul.bf16 %v1614, 1061961548
    %v1679 = vmul.bf16 %v1615, 1061961548
    %v1680 = vmul.bf16 %v1616, 1061961548
    %v1681 = vmul.bf16 %v1617, 1061961548
    %v1682 = vmul.bf16 %v1618, 1061961548
    %v1683 = vmul.bf16 %v1619, 1061961548
    %v1684 = vmul.bf16 %v1620, 1061961548
    %v1685 = vmul.bf16 %v1621, 1061961548
    %v1686 = vmul.bf16 %v1622, 1061961548
    %v1687 = vmul.bf16 %v1623, 1061961548
    %v1688 = vmul.bf16 %v1624, 1061961548
    %v1689 = vmul.bf16 %v1625, 1061961548
    %v1690 = vmul.bf16 %v1626, 1061961548
    %v1691 = vmul.bf16 %v1627, 1061961548
    %v1692 = vmul.bf16 %v1628, 1061961548
    %v1693 = vmul.bf16 %v1629, 1061961548
    %v1694 = vmul.bf16 %v1630, 1061961548
    %v1695 = vmul.bf16 %v1631, 1061961548
    %v1696 = vmul.bf16 %v1632, 1061961548
    %v1697 = vmul.bf16 %v1633, 1061961548
    %v1698 = vmul.bf16 %v1634, 1061961548
    %v1699 = vmul.bf16 %v1635, 1061961548
    %v1700 = vmul.bf16 %v1636, 1061961548
    %v1701 = vmul.bf16 %v1637, 1061961548
    %v1702 = vmul.bf16 %v1638, 1061961548
    %v1703 = vmul.bf16 %v1639, 1061961548
    %v1704 = vmul.bf16 %v1640, 1061961548
    %v1705 = vmul.bf16 %v1641, 1061961548
    %v1706 = vmul.bf16 %v1642, 1061961548
    %v1707 = vmul.bf16 %v1643, 1061961548
    %v1708 = vmul.bf16 %v1644, 1061961548
    %v1709 = vmul.bf16 %v1645, 1061961548
    %v1710 = vmul.bf16 %v1646, 1061961548
    %v1711 = vmul.bf16 %v1647, 1061961548
    %v1712 = vmul.bf16 %v1648, 1061961548
    %v1713 = vmul.bf16 %v1649, 1061961548
    %v1714 = vmul.bf16 %v1650, 1061961548
    %v1715 = vmul.bf16 %v1651, 1061961548
    %v1716 = vmul.bf16 %v1652, 1061961548
    %v1717 = vmul.bf16 %v1653, 1061961548
    %v1718 = vmul.bf16 %v1654, 1061961548
    %v1719 = vmul.bf16 %v1655, 1061961548
    %v1720 = vmul.bf16 %v1656, 1061961548
    %v1721 = vmul.bf16 %v1657, 1061961548
    %v1722 = vmul.bf16 %v1658, 1061961548
    %v1723 = vmul.bf16 %v1659, 1061961548
    %v1724 = vmul.bf16 %v1660, 1061961548
    %v1725 = vmul.bf16 %v1661, 1061961548
    %v1726 = vmul.bf16 %v1662, 1061961548
    %v1727 = vmul.bf16 %v1663, 1061961548
    %v1728 = vmul.bf16 %v1664, 1061961548
    %v1729 = vmul.bf16 %v1665, 1061961548
    %v1730 = vmul.bf16 %v1666, 1061961548
    %v1731 = vmul.bf16 %v1667, 1061961548
    %v1732 = vmul.bf16 %v1668, 1061961548
    %v1733 = vmul.bf16 %v1669, 1061961548
    %v1734 = vmul.bf16 %v1670, 1061961548
    %v1735 = vmul.bf16 %v1671, 1061961548
    %v1736 = vtanh.bf16.pop %v1672
    %v1737 = vtanh.bf16.pop %v1673
    %v1738 = vtanh.bf16.pop %v1674
    %v1739 = vtanh.bf16.pop %v1675
    %v1740 = vtanh.bf16.pop %v1676
    %v1741 = vtanh.bf16.pop %v1677
    %v1742 = vtanh.bf16.pop %v1678
    %v1743 = vtanh.bf16.pop %v1679
    %v1744 = vtanh.bf16.pop %v1680
    %v1745 = vtanh.bf16.pop %v1681
    %v1746 = vtanh.bf16.pop %v1682
    %v1747 = vtanh.bf16.pop %v1683
    %v1748 = vtanh.bf16.pop %v1684
    %v1749 = vtanh.bf16.pop %v1685
    %v1750 = vtanh.bf16.pop %v1686
    %v1751 = vtanh.bf16.pop %v1687
    %v1752 = vtanh.bf16.pop %v1688
    %v1753 = vtanh.bf16.pop %v1689
    %v1754 = vtanh.bf16.pop %v1690
    %v1755 = vtanh.bf16.pop %v1691
    %v1756 = vtanh.bf16.pop %v1692
    %v1757 = vtanh.bf16.pop %v1693
    %v1758 = vtanh.bf16.pop %v1694
    %v1759 = vtanh.bf16.pop %v1695
    %v1760 = vtanh.bf16.pop %v1696
    %v1761 = vtanh.bf16.pop %v1697
    %v1762 = vtanh.bf16.pop %v1698
    %v1763 = vtanh.bf16.pop %v1699
    %v1764 = vtanh.bf16.pop %v1700
    %v1765 = vtanh.bf16.pop %v1701
    %v1766 = vtanh.bf16.pop %v1702
    %v1767 = vtanh.bf16.pop %v1703
    %v1768 = vtanh.bf16.pop %v1704
    %v1769 = vtanh.bf16.pop %v1705
    %v1770 = vtanh.bf16.pop %v1706
    %v1771 = vtanh.bf16.pop %v1707
    %v1772 = vtanh.bf16.pop %v1708
    %v1773 = vtanh.bf16.pop %v1709
    %v1774 = vtanh.bf16.pop %v1710
    %v1775 = vtanh.bf16.pop %v1711
    %v1776 = vtanh.bf16.pop %v1712
    %v1777 = vtanh.bf16.pop %v1713
    %v1778 = vtanh.bf16.pop %v1714
    %v1779 = vtanh.bf16.pop %v1715
    %v1780 = vtanh.bf16.pop %v1716
    %v1781 = vtanh.bf16.pop %v1717
    %v1782 = vtanh.bf16.pop %v1718
    %v1783 = vtanh.bf16.pop %v1719
    %v1784 = vtanh.bf16.pop %v1720
    %v1785 = vtanh.bf16.pop %v1721
    %v1786 = vtanh.bf16.pop %v1722
    %v1787 = vtanh.bf16.pop %v1723
    %v1788 = vtanh.bf16.pop %v1724
    %v1789 = vtanh.bf16.pop %v1725
    %v1790 = vtanh.bf16.pop %v1726
    %v1791 = vtanh.bf16.pop %v1727
    %v1792 = vtanh.bf16.pop %v1728
    %v1793 = vtanh.bf16.pop %v1729
    %v1794 = vtanh.bf16.pop %v1730
    %v1795 = vtanh.bf16.pop %v1731
    %v1796 = vtanh.bf16.pop %v1732
    %v1797 = vtanh.bf16.pop %v1733
    %v1798 = vtanh.bf16.pop %v1734
    %v1799 = vtanh.bf16.pop %v1735
    %v1800 = vadd.bf16 %v1736, 1065369472
    %v1801 = vadd.bf16 %v1737, 1065369472
    %v1802 = vadd.bf16 %v1738, 1065369472
    %v1803 = vadd.bf16 %v1739, 1065369472
    %v1804 = vadd.bf16 %v1740, 1065369472
    %v1805 = vadd.bf16 %v1741, 1065369472
    %v1806 = vadd.bf16 %v1742, 1065369472
    %v1807 = vadd.bf16 %v1743, 1065369472
    %v1808 = vadd.bf16 %v1744, 1065369472
    %v1809 = vadd.bf16 %v1745, 1065369472
    %v1810 = vadd.bf16 %v1746, 1065369472
    %v1811 = vadd.bf16 %v1747, 1065369472
    %v1812 = vadd.bf16 %v1748, 1065369472
    %v1813 = vadd.bf16 %v1749, 1065369472
    %v1814 = vadd.bf16 %v1750, 1065369472
    %v1815 = vadd.bf16 %v1751, 1065369472
    %v1816 = vadd.bf16 %v1752, 1065369472
    %v1817 = vadd.bf16 %v1753, 1065369472
    %v1818 = vadd.bf16 %v1754, 1065369472
    %v1819 = vadd.bf16 %v1755, 1065369472
    %v1820 = vadd.bf16 %v1756, 1065369472
    %v1821 = vadd.bf16 %v1757, 1065369472
    %v1822 = vadd.bf16 %v1758, 1065369472
    %v1823 = vadd.bf16 %v1759, 1065369472
    %v1824 = vadd.bf16 %v1760, 1065369472
    %v1825 = vadd.bf16 %v1761, 1065369472
    %v1826 = vadd.bf16 %v1762, 1065369472
    %v1827 = vadd.bf16 %v1763, 1065369472
    %v1828 = vadd.bf16 %v1764, 1065369472
    %v1829 = vadd.bf16 %v1765, 1065369472
    %v1830 = vadd.bf16 %v1766, 1065369472
    %v1831 = vadd.bf16 %v1767, 1065369472
    %v1832 = vadd.bf16 %v1768, 1065369472
    %v1833 = vadd.bf16 %v1769, 1065369472
    %v1834 = vadd.bf16 %v1770, 1065369472
    %v1835 = vadd.bf16 %v1771, 1065369472
    %v1836 = vadd.bf16 %v1772, 1065369472
    %v1837 = vadd.bf16 %v1773, 1065369472
    %v1838 = vadd.bf16 %v1774, 1065369472
    %v1839 = vadd.bf16 %v1775, 1065369472
    %v1840 = vadd.bf16 %v1776, 1065369472
    %v1841 = vadd.bf16 %v1777, 1065369472
    %v1842 = vadd.bf16 %v1778, 1065369472
    %v1843 = vadd.bf16 %v1779, 1065369472
    %v1844 = vadd.bf16 %v1780, 1065369472
    %v1845 = vadd.bf16 %v1781, 1065369472
    %v1846 = vadd.bf16 %v1782, 1065369472
    %v1847 = vadd.bf16 %v1783, 1065369472
    %v1848 = vadd.bf16 %v1784, 1065369472
    %v1849 = vadd.bf16 %v1785, 1065369472
    %v1850 = vadd.bf16 %v1786, 1065369472
    %v1851 = vadd.bf16 %v1787, 1065369472
    %v1852 = vadd.bf16 %v1788, 1065369472
    %v1853 = vadd.bf16 %v1789, 1065369472
    %v1854 = vadd.bf16 %v1790, 1065369472
    %v1855 = vadd.bf16 %v1791, 1065369472
    %v1856 = vadd.bf16 %v1792, 1065369472
    %v1857 = vadd.bf16 %v1793, 1065369472
    %v1858 = vadd.bf16 %v1794, 1065369472
    %v1859 = vadd.bf16 %v1795, 1065369472
    %v1860 = vadd.bf16 %v1796, 1065369472
    %v1861 = vadd.bf16 %v1797, 1065369472
    %v1862 = vadd.bf16 %v1798, 1065369472
    %v1863 = vadd.bf16 %v1799, 1065369472
    %v1864 = vmul.bf16 %v1800, 1056980736
    %v1865 = vmul.bf16 %v1801, 1056980736
    %v1866 = vmul.bf16 %v1802, 1056980736
    %v1867 = vmul.bf16 %v1803, 1056980736
    %v1868 = vmul.bf16 %v1804, 1056980736
    %v1869 = vmul.bf16 %v1805, 1056980736
    %v1870 = vmul.bf16 %v1806, 1056980736
    %v1871 = vmul.bf16 %v1807, 1056980736
    %v1872 = vmul.bf16 %v1808, 1056980736
    %v1873 = vmul.bf16 %v1809, 1056980736
    %v1874 = vmul.bf16 %v1810, 1056980736
    %v1875 = vmul.bf16 %v1811, 1056980736
    %v1876 = vmul.bf16 %v1812, 1056980736
    %v1877 = vmul.bf16 %v1813, 1056980736
    %v1878 = vmul.bf16 %v1814, 1056980736
    %v1879 = vmul.bf16 %v1815, 1056980736
    %v1880 = vmul.bf16 %v1816, 1056980736
    %v1881 = vmul.bf16 %v1817, 1056980736
    %v1882 = vmul.bf16 %v1818, 1056980736
    %v1883 = vmul.bf16 %v1819, 1056980736
    %v1884 = vmul.bf16 %v1820, 1056980736
    %v1885 = vmul.bf16 %v1821, 1056980736
    %v1886 = vmul.bf16 %v1822, 1056980736
    %v1887 = vmul.bf16 %v1823, 1056980736
    %v1888 = vmul.bf16 %v1824, 1056980736
    %v1889 = vmul.bf16 %v1825, 1056980736
    %v1890 = vmul.bf16 %v1826, 1056980736
    %v1891 = vmul.bf16 %v1827, 1056980736
    %v1892 = vmul.bf16 %v1828, 1056980736
    %v1893 = vmul.bf16 %v1829, 1056980736
    %v1894 = vmul.bf16 %v1830, 1056980736
    %v1895 = vmul.bf16 %v1831, 1056980736
    %v1896 = vmul.bf16 %v1832, 1056980736
    %v1897 = vmul.bf16 %v1833, 1056980736
    %v1898 = vmul.bf16 %v1834, 1056980736
    %v1899 = vmul.bf16 %v1835, 1056980736
    %v1900 = vmul.bf16 %v1836, 1056980736
    %v1901 = vmul.bf16 %v1837, 1056980736
    %v1902 = vmul.bf16 %v1838, 1056980736
    %v1903 = vmul.bf16 %v1839, 1056980736
    %v1904 = vmul.bf16 %v1840, 1056980736
    %v1905 = vmul.bf16 %v1841, 1056980736
    %v1906 = vmul.bf16 %v1842, 1056980736
    %v1907 = vmul.bf16 %v1843, 1056980736
    %v1908 = vmul.bf16 %v1844, 1056980736
    %v1909 = vmul.bf16 %v1845, 1056980736
    %v1910 = vmul.bf16 %v1846, 1056980736
    %v1911 = vmul.bf16 %v1847, 1056980736
    %v1912 = vmul.bf16 %v1848, 1056980736
    %v1913 = vmul.bf16 %v1849, 1056980736
    %v1914 = vmul.bf16 %v1850, 1056980736
    %v1915 = vmul.bf16 %v1851, 1056980736
    %v1916 = vmul.bf16 %v1852, 1056980736
    %v1917 = vmul.bf16 %v1853, 1056980736
    %v1918 = vmul.bf16 %v1854, 1056980736
    %v1919 = vmul.bf16 %v1855, 1056980736
    %v1920 = vmul.bf16 %v1856, 1056980736
    %v1921 = vmul.bf16 %v1857, 1056980736
    %v1922 = vmul.bf16 %v1858, 1056980736
    %v1923 = vmul.bf16 %v1859, 1056980736
    %v1924 = vmul.bf16 %v1860, 1056980736
    %v1925 = vmul.bf16 %v1861, 1056980736
    %v1926 = vmul.bf16 %v1862, 1056980736
    %v1927 = vmul.bf16 %v1863, 1056980736
    %v1928 = vmul.bf16 %v1352, %v1864
    %v1929 = vmul.bf16 %v1353, %v1865
    %v1930 = vmul.bf16 %v1354, %v1866
    %v1931 = vmul.bf16 %v1355, %v1867
    %v1932 = vmul.bf16 %v1356, %v1868
    %v1933 = vmul.bf16 %v1357, %v1869
    %v1934 = vmul.bf16 %v1358, %v1870
    %v1935 = vmul.bf16 %v1359, %v1871
    %v1936 = vmul.bf16 %v1360, %v1872
    %v1937 = vmul.bf16 %v1361, %v1873
    %v1938 = vmul.bf16 %v1362, %v1874
    %v1939 = vmul.bf16 %v1363, %v1875
    %v1940 = vmul.bf16 %v1364, %v1876
    %v1941 = vmul.bf16 %v1365, %v1877
    %v1942 = vmul.bf16 %v1366, %v1878
    %v1943 = vmul.bf16 %v1367, %v1879
    %v1944 = vmul.bf16 %v1368, %v1880
    %v1945 = vmul.bf16 %v1369, %v1881
    %v1946 = vmul.bf16 %v1370, %v1882
    %v1947 = vmul.bf16 %v1371, %v1883
    %v1948 = vmul.bf16 %v1372, %v1884
    %v1949 = vmul.bf16 %v1373, %v1885
    %v1950 = vmul.bf16 %v1374, %v1886
    %v1951 = vmul.bf16 %v1375, %v1887
    %v1952 = vmul.bf16 %v1376, %v1888
    %v1953 = vmul.bf16 %v1377, %v1889
    %v1954 = vmul.bf16 %v1378, %v1890
    %v1955 = vmul.bf16 %v1379, %v1891
    %v1956 = vmul.bf16 %v1380, %v1892
    %v1957 = vmul.bf16 %v1381, %v1893
    %v1958 = vmul.bf16 %v1382, %v1894
    %v1959 = vmul.bf16 %v1383, %v1895
    %v1960 = vmul.bf16 %v1384, %v1896
    %v1961 = vmul.bf16 %v1385, %v1897
    %v1962 = vmul.bf16 %v1386, %v1898
    %v1963 = vmul.bf16 %v1387, %v1899
    %v1964 = vmul.bf16 %v1388, %v1900
    %v1965 = vmul.bf16 %v1389, %v1901
    %v1966 = vmul.bf16 %v1390, %v1902
    %v1967 = vmul.bf16 %v1391, %v1903
    %v1968 = vmul.bf16 %v1392, %v1904
    %v1969 = vmul.bf16 %v1393, %v1905
    %v1970 = vmul.bf16 %v1394, %v1906
    %v1971 = vmul.bf16 %v1395, %v1907
    %v1972 = vmul.bf16 %v1396, %v1908
    %v1973 = vmul.bf16 %v1397, %v1909
    %v1974 = vmul.bf16 %v1398, %v1910
    %v1975 = vmul.bf16 %v1399, %v1911
    %v1976 = vmul.bf16 %v1400, %v1912
    %v1977 = vmul.bf16 %v1401, %v1913
    %v1978 = vmul.bf16 %v1402, %v1914
    %v1979 = vmul.bf16 %v1403, %v1915
    %v1980 = vmul.bf16 %v1404, %v1916
    %v1981 = vmul.bf16 %v1405, %v1917
    %v1982 = vmul.bf16 %v1406, %v1918
    %v1983 = vmul.bf16 %v1407, %v1919
    %v1984 = vmul.bf16 %v1408, %v1920
    %v1985 = vmul.bf16 %v1409, %v1921
    %v1986 = vmul.bf16 %v1410, %v1922
    %v1987 = vmul.bf16 %v1411, %v1923
    %v1988 = vmul.bf16 %v1412, %v1924
    %v1989 = vmul.bf16 %v1413, %v1925
    %v1990 = vmul.bf16 %v1414, %v1926
    %v1991 = vmul.bf16 %v1415, %v1927
    %v1992 = vld [vmem:[#allocation8] sm:$0xf]
    %v1993 = vld [vmem:[#allocation8 + $0x4] sm:$0xf]
    %v1994 = vld [vmem:[#allocation8 + $0x8] sm:$0xf]
    %v1995 = vld [vmem:[#allocation8 + $0xc] sm:$0xf]
    %v1996 = vld [vmem:[#allocation8 + $0x10] sm:$0xf]
    %v1997 = vld [vmem:[#allocation8 + $0x14] sm:$0xf]
    %v1998 = vld [vmem:[#allocation8 + $0x18] sm:$0xf]
    %v1999 = vld [vmem:[#allocation8 + $0x1c] sm:$0xf]
    %v2000 = vld [vmem:[#allocation8 + $0x20] sm:$0xf]
    %v2001 = vld [vmem:[#allocation8 + $0x24] sm:$0xf]
    %v2002 = vld [vmem:[#allocation8 + $0x28] sm:$0xf]
    %v2003 = vld [vmem:[#allocation8 + $0x2c] sm:$0xf]
    %v2004 = vld [vmem:[#allocation8 + $0x30] sm:$0xf]
    %v2005 = vld [vmem:[#allocation8 + $0x34] sm:$0xf]
    %v2006 = vld [vmem:[#allocation8 + $0x38] sm:$0xf]
    %v2007 = vld [vmem:[#allocation8 + $0x3c] sm:$0xf]
    %v2008 = vld [vmem:[#allocation8 + $0x40] sm:$0xf]
    %v2009 = vld [vmem:[#allocation8 + $0x44] sm:$0xf]
    %v2010 = vld [vmem:[#allocation8 + $0x48] sm:$0xf]
    %v2011 = vld [vmem:[#allocation8 + $0x4c] sm:$0xf]
    %v2012 = vld [vmem:[#allocation8 + $0x50] sm:$0xf]
    %v2013 = vld [vmem:[#allocation8 + $0x54] sm:$0xf]
    %v2014 = vld [vmem:[#allocation8 + $0x58] sm:$0xf]
    %v2015 = vld [vmem:[#allocation8 + $0x5c] sm:$0xf]
    %v2016 = vld [vmem:[#allocation8 + $0x60] sm:$0xf]
    %v2017 = vld [vmem:[#allocation8 + $0x64] sm:$0xf]
    %v2018 = vld [vmem:[#allocation8 + $0x68] sm:$0xf]
    %v2019 = vld [vmem:[#allocation8 + $0x6c] sm:$0xf]
    %v2020 = vld [vmem:[#allocation8 + $0x70] sm:$0xf]
    %v2021 = vld [vmem:[#allocation8 + $0x74] sm:$0xf]
    %v2022 = vld [vmem:[#allocation8 + $0x78] sm:$0xf]
    %v2023 = vld [vmem:[#allocation8 + $0x7c] sm:$0xf]
    %v2024 = vld [vmem:[#allocation10] sm:$0x1]
    %v2026 = vlaneseq
    %v2027 = vshrl.u32 %v2026, 7
    %v2028 = vsub.s32 0, %v2027
    %v2029 = vrot.slane %v2024, %v2028
    %v2063 = vunpack.c.l.b16 %v1992
    %v2064 = vunpack.c.l.b16 %v1993
    %v2065 = vunpack.c.l.b16 %v1994
    %v2066 = vunpack.c.l.b16 %v1995
    %v2067 = vunpack.c.l.b16 %v1996
    %v2068 = vunpack.c.l.b16 %v1997
    %v2069 = vunpack.c.l.b16 %v1998
    %v2070 = vunpack.c.l.b16 %v1999
    %v2071 = vunpack.c.l.b16 %v2000
    %v2072 = vunpack.c.l.b16 %v2001
    %v2073 = vunpack.c.l.b16 %v2002
    %v2074 = vunpack.c.l.b16 %v2003
    %v2075 = vunpack.c.l.b16 %v2004
    %v2076 = vunpack.c.l.b16 %v2005
    %v2077 = vunpack.c.l.b16 %v2006
    %v2078 = vunpack.c.l.b16 %v2007
    %v2079 = vunpack.c.l.b16 %v2008
    %v2080 = vunpack.c.l.b16 %v2009
    %v2081 = vunpack.c.l.b16 %v2010
    %v2082 = vunpack.c.l.b16 %v2011
    %v2083 = vunpack.c.l.b16 %v2012
    %v2084 = vunpack.c.l.b16 %v2013
    %v2085 = vunpack.c.l.b16 %v2014
    %v2086 = vunpack.c.l.b16 %v2015
    %v2087 = vunpack.c.l.b16 %v2016
    %v2088 = vunpack.c.l.b16 %v2017
    %v2089 = vunpack.c.l.b16 %v2018
    %v2090 = vunpack.c.l.b16 %v2019
    %v2091 = vunpack.c.l.b16 %v2020
    %v2092 = vunpack.c.l.b16 %v2021
    %v2093 = vunpack.c.l.b16 %v2022
    %v2094 = vunpack.c.l.b16 %v2023
    %v2095 = vpack.c.b16 %v2064, %v2063
    %v2096 = vpack.c.b16 %v2066, %v2065
    %v2097 = vpack.c.b16 %v2068, %v2067
    %v2098 = vpack.c.b16 %v2070, %v2069
    %v2099 = vpack.c.b16 %v2072, %v2071
    %v2100 = vpack.c.b16 %v2074, %v2073
    %v2101 = vpack.c.b16 %v2076, %v2075
    %v2102 = vpack.c.b16 %v2078, %v2077
    %v2103 = vpack.c.b16 %v2080, %v2079
    %v2104 = vpack.c.b16 %v2082, %v2081
    %v2105 = vpack.c.b16 %v2084, %v2083
    %v2106 = vpack.c.b16 %v2086, %v2085
    %v2107 = vpack.c.b16 %v2088, %v2087
    %v2108 = vpack.c.b16 %v2090, %v2089
    %v2109 = vpack.c.b16 %v2092, %v2091
    %v2110 = vpack.c.b16 %v2094, %v2093
    %2127 = vmatprep.subr.bf16.mxu0 0
    %2128 = vmatpush1.bf16.msra.mxu0 %v2095
    %2129 = vmatprep.subr.bf16.mxu0 0
    %2130 = vmatpush1.bf16.msra.mxu0 %v2096
    %2131 = vmatprep.subr.bf16.mxu0 0
    %2132 = vmatpush1.bf16.msra.mxu0 %v2097
    %2133 = vmatprep.subr.bf16.mxu0 0
    %2134 = vmatpush1.bf16.msra.mxu0 %v2098
    %2135 = vmatprep.subr.bf16.mxu0 0
    %2136 = vmatpush1.bf16.msra.mxu0 %v2099
    %2137 = vmatprep.subr.bf16.mxu0 0
    %2138 = vmatpush1.bf16.msra.mxu0 %v2100
    %2139 = vmatprep.subr.bf16.mxu0 0
    %2140 = vmatpush1.bf16.msra.mxu0 %v2101
    %2141 = vmatprep.subr.bf16.mxu0 0
    %2142 = vmatpush1.bf16.msra.mxu0 %v2102
    %2143 = vmatprep.subr.bf16.mxu0 0
    %2144 = vmatpush1.bf16.msra.mxu0 %v2103
    %2145 = vmatprep.subr.bf16.mxu0 0
    %2146 = vmatpush1.bf16.msra.mxu0 %v2104
    %2147 = vmatprep.subr.bf16.mxu0 0
    %2148 = vmatpush1.bf16.msra.mxu0 %v2105
    %2149 = vmatprep.subr.bf16.mxu0 0
    %2150 = vmatpush1.bf16.msra.mxu0 %v2106
    %2151 = vmatprep.subr.bf16.mxu0 0
    %2152 = vmatpush1.bf16.msra.mxu0 %v2107
    %2153 = vmatprep.subr.bf16.mxu0 0
    %2154 = vmatpush1.bf16.msra.mxu0 %v2108
    %2155 = vmatprep.subr.bf16.mxu0 0
    %2156 = vmatpush1.bf16.msra.mxu0 %v2109
    %2157 = vmatprep.subr.bf16.mxu0 0
    %2158 = vmatpush1.bf16.msra.mxu0 %v2110
    %2159 = vmatprep.mubr.bf16.mxu0 %v1929
    %2160 = vmatmul.mubr.bf16.gmra.mrb[0].mxu0 %v1928
    %v2161 = vpop.f32.mrb[0].mxu0
    %v2162 = vadd.f32 %v2029, %v2161
    %v2163 = vpop.f32.mrb[0].mxu0
    %v2164 = vpop.f32.mrb[0].mxu0
    %v2165 = vadd.f32 %v2029, %v2164
    %v2166 = vpop.f32.mrb[0].mxu0
    %2167 = vmatprep.mubr.bf16.mxu0 %v1931
    %2168 = vmatmul.mubr.bf16.gmra.mrb[0].mxu0 %v1930
    %v2169 = vpop.f32.mrb[0].mxu0
    %v2170 = vadd.f32 %v2029, %v2169
    %v2171 = vpop.f32.mrb[0].mxu0
    %v2172 = vpop.f32.mrb[0].mxu0
    %v2173 = vadd.f32 %v2029, %v2172
    %v2174 = vpop.f32.mrb[0].mxu0
    %2175 = vmatprep.mubr.bf16.mxu0 %v1933
    %2176 = vmatmul.mubr.bf16.gmra.mrb[0].mxu0 %v1932
    %v2177 = vpop.f32.mrb[0].mxu0
    %v2178 = vadd.f32 %v2029, %v2177
    %v2179 = vpop.f32.mrb[0].mxu0
    %v2180 = vpop.f32.mrb[0].mxu0
    %v2181 = vadd.f32 %v2029, %v2180
    %v2182 = vpop.f32.mrb[0].mxu0
    %2183 = vmatprep.mubr.bf16.mxu0 %v1935
    %2184 = vmatmul.mubr.bf16.gmra.mrb[0].mxu0 %v1934
    %v2185 = vpop.f32.mrb[0].mxu0
    %v2186 = vadd.f32 %v2029, %v2185
    %v2187 = vpop.f32.mrb[0].mxu0
    %v2188 = vpop.f32.mrb[0].mxu0
    %v2189 = vadd.f32 %v2029, %v2188
    %v2190 = vpop.f32.mrb[0].mxu0
    %2191 = vmatprep.mubr.bf16.mxu0 %v1937
    %2192 = vmatmul.mubr.bf16.gmra.mrb[0].mxu0 %v1936
    %v2193 = vpop.f32.mrb[0].mxu0
    %v2194 = vadd.f32 %v2029, %v2193
    %v2195 = vpop.f32.mrb[0].mxu0
    %v2196 = vpop.f32.mrb[0].mxu0
    %v2197 = vadd.f32 %v2029, %v2196
    %v2198 = vpop.f32.mrb[0].mxu0
    %2199 = vmatprep.mubr.bf16.mxu0 %v1939
    %2200 = vmatmul.mubr.bf16.gmra.mrb[0].mxu0 %v1938
    %v2201 = vpop.f32.mrb[0].mxu0
    %v2202 = vadd.f32 %v2029, %v2201
    %v2203 = vpop.f32.mrb[0].mxu0
    %v2204 = vpop.f32.mrb[0].mxu0
    %v2205 = vadd.f32 %v2029, %v2204
    %v2206 = vpop.f32.mrb[0].mxu0
    %2207 = vmatprep.mubr.bf16.mxu0 %v1941
    %2208 = vmatmul.mubr.bf16.gmra.mrb[0].mxu0 %v1940
    %v2209 = vpop.f32.mrb[0].mxu0
    %v2210 = vadd.f32 %v2029, %v2209
    %v2211 = vpop.f32.mrb[0].mxu0
    %v2212 = vpop.f32.mrb[0].mxu0
    %v2213 = vadd.f32 %v2029, %v2212
    %v2214 = vpop.f32.mrb[0].mxu0
    %2215 = vmatprep.mubr.bf16.mxu0 %v1943
    %2216 = vmatmul.mubr.bf16.gmra.mrb[0].mxu0 %v1942
    %v2217 = vpop.f32.mrb[0].mxu0
    %v2218 = vadd.f32 %v2029, %v2217
    %v2219 = vpop.f32.mrb[0].mxu0
    %v2220 = vpop.f32.mrb[0].mxu0
    %v2221 = vadd.f32 %v2029, %v2220
    %v2222 = vpop.f32.mrb[0].mxu0
    %2223 = vmatprep.mubr.bf16.mxu0 %v1945
    %2224 = vmatmul.mubr.bf16.gmra.mrb[0].mxu0 %v1944
    %v2225 = vpop.f32.mrb[0].mxu0
    %v2226 = vadd.f32 %v2029, %v2225
    %v2227 = vpop.f32.mrb[0].mxu0
    %v2228 = vpop.f32.mrb[0].mxu0
    %v2229 = vadd.f32 %v2029, %v2228
    %v2230 = vpop.f32.mrb[0].mxu0
    %2231 = vmatprep.mubr.bf16.mxu0 %v1947
    %2232 = vmatmul.mubr.bf16.gmra.mrb[0].mxu0 %v1946
    %v2233 = vpop.f32.mrb[0].mxu0
    %v2234 = vadd.f32 %v2029, %v2233
    %v2235 = vpop.f32.mrb[0].mxu0
    %v2236 = vpop.f32.mrb[0].mxu0
    %v2237 = vadd.f32 %v2029, %v2236
    %v2238 = vpop.f32.mrb[0].mxu0
    %2239 = vmatprep.mubr.bf16.mxu0 %v1949
    %2240 = vmatmul.mubr.bf16.gmra.mrb[0].mxu0 %v1948
    %v2241 = vpop.f32.mrb[0].mxu0
    %v2242 = vadd.f32 %v2029, %v2241
    %v2243 = vpop.f32.mrb[0].mxu0
    %v2244 = vpop.f32.mrb[0].mxu0
    %v2245 = vadd.f32 %v2029, %v2244
    %v2246 = vpop.f32.mrb[0].mxu0
    %2247 = vmatprep.mubr.bf16.mxu0 %v1951
    %2248 = vmatmul.mubr.bf16.gmra.mrb[0].mxu0 %v1950
    %v2249 = vpop.f32.mrb[0].mxu0
    %v2250 = vadd.f32 %v2029, %v2249
    %v2251 = vpop.f32.mrb[0].mxu0
    %v2252 = vpop.f32.mrb[0].mxu0
    %v2253 = vadd.f32 %v2029, %v2252
    %v2254 = vpop.f32.mrb[0].mxu0
    %2255 = vmatprep.mubr.bf16.mxu0 %v1953
    %2256 = vmatmul.mubr.bf16.gmra.mrb[0].mxu0 %v1952
    %v2257 = vpop.f32.mrb[0].mxu0
    %v2258 = vadd.f32 %v2029, %v2257
    %v2259 = vpop.f32.mrb[0].mxu0
    %v2260 = vpop.f32.mrb[0].mxu0
    %v2261 = vadd.f32 %v2029, %v2260
    %v2262 = vpop.f32.mrb[0].mxu0
    %2263 = vmatprep.mubr.bf16.mxu0 %v1955
    %2264 = vmatmul.mubr.bf16.gmra.mrb[0].mxu0 %v1954
    %v2265 = vpop.f32.mrb[0].mxu0
    %v2266 = vadd.f32 %v2029, %v2265
    %v2267 = vpop.f32.mrb[0].mxu0
    %v2268 = vpop.f32.mrb[0].mxu0
    %v2269 = vadd.f32 %v2029, %v2268
    %v2270 = vpop.f32.mrb[0].mxu0
    %2271 = vmatprep.mubr.bf16.mxu0 %v1957
    %2272 = vmatmul.mubr.bf16.gmra.mrb[0].mxu0 %v1956
    %v2273 = vpop.f32.mrb[0].mxu0
    %v2274 = vadd.f32 %v2029, %v2273
    %v2275 = vpop.f32.mrb[0].mxu0
    %v2276 = vpop.f32.mrb[0].mxu0
    %v2277 = vadd.f32 %v2029, %v2276
    %v2278 = vpop.f32.mrb[0].mxu0
    %2279 = vmatprep.mubr.bf16.mxu0 %v1959
    %2280 = vmatmul.mubr.bf16.gmra.mrb[0].mxu0 %v1958
    %v2281 = vpop.f32.mrb[0].mxu0
    %v2282 = vadd.f32 %v2029, %v2281
    %v2283 = vpop.f32.mrb[0].mxu0
    %v2284 = vpop.f32.mrb[0].mxu0
    %v2285 = vadd.f32 %v2029, %v2284
    %v2286 = vpop.f32.mrb[0].mxu0
    %2287 = vmatprep.mubr.bf16.mxu0 %v1961
    %2288 = vmatmul.mubr.bf16.gmra.mrb[0].mxu0 %v1960
    %v2289 = vpop.f32.mrb[0].mxu0
    %v2290 = vadd.f32 %v2029, %v2289
    %v2291 = vpop.f32.mrb[0].mxu0
    %v2292 = vpop.f32.mrb[0].mxu0
    %v2293 = vadd.f32 %v2029, %v2292
    %v2294 = vpop.f32.mrb[0].mxu0
    %2295 = vmatprep.mubr.bf16.mxu0 %v1963
    %2296 = vmatmul.mubr.bf16.gmra.mrb[0].mxu0 %v1962
    %v2297 = vpop.f32.mrb[0].mxu0
    %v2298 = vadd.f32 %v2029, %v2297
    %v2299 = vpop.f32.mrb[0].mxu0
    %v2300 = vpop.f32.mrb[0].mxu0
    %v2301 = vadd.f32 %v2029, %v2300
    %v2302 = vpop.f32.mrb[0].mxu0
    %2303 = vmatprep.mubr.bf16.mxu0 %v1965
    %2304 = vmatmul.mubr.bf16.gmra.mrb[0].mxu0 %v1964
    %v2305 = vpop.f32.mrb[0].mxu0
    %v2306 = vadd.f32 %v2029, %v2305
    %v2307 = vpop.f32.mrb[0].mxu0
    %v2308 = vpop.f32.mrb[0].mxu0
    %v2309 = vadd.f32 %v2029, %v2308
    %v2310 = vpop.f32.mrb[0].mxu0
    %2311 = vmatprep.mubr.bf16.mxu0 %v1967
    %2312 = vmatmul.mubr.bf16.gmra.mrb[0].mxu0 %v1966
    %v2313 = vpop.f32.mrb[0].mxu0
    %v2314 = vadd.f32 %v2029, %v2313
    %v2315 = vpop.f32.mrb[0].mxu0
    %v2316 = vpop.f32.mrb[0].mxu0
    %v2317 = vadd.f32 %v2029, %v2316
    %v2318 = vpop.f32.mrb[0].mxu0
    %2319 = vmatprep.mubr.bf16.mxu0 %v1969
    %2320 = vmatmul.mubr.bf16.gmra.mrb[0].mxu0 %v1968
    %v2321 = vpop.f32.mrb[0].mxu0
    %v2322 = vadd.f32 %v2029, %v2321
    %v2323 = vpop.f32.mrb[0].mxu0
    %v2324 = vpop.f32.mrb[0].mxu0
    %v2325 = vadd.f32 %v2029, %v2324
    %v2326 = vpop.f32.mrb[0].mxu0
    %2327 = vmatprep.mubr.bf16.mxu0 %v1971
    %2328 = vmatmul.mubr.bf16.gmra.mrb[0].mxu0 %v1970
    %v2329 = vpop.f32.mrb[0].mxu0
    %v2330 = vadd.f32 %v2029, %v2329
    %v2331 = vpop.f32.mrb[0].mxu0
    %v2332 = vpop.f32.mrb[0].mxu0
    %v2333 = vadd.f32 %v2029, %v2332
    %v2334 = vpop.f32.mrb[0].mxu0
    %2335 = vmatprep.mubr.bf16.mxu0 %v1973
    %2336 = vmatmul.mubr.bf16.gmra.mrb[0].mxu0 %v1972
    %v2337 = vpop.f32.mrb[0].mxu0
    %v2338 = vadd.f32 %v2029, %v2337
    %v2339 = vpop.f32.mrb[0].mxu0
    %v2340 = vpop.f32.mrb[0].mxu0
    %v2341 = vadd.f32 %v2029, %v2340
    %v2342 = vpop.f32.mrb[0].mxu0
    %2343 = vmatprep.mubr.bf16.mxu0 %v1975
    %2344 = vmatmul.mubr.bf16.gmra.mrb[0].mxu0 %v1974
    %v2345 = vpop.f32.mrb[0].mxu0
    %v2346 = vadd.f32 %v2029, %v2345
    %v2347 = vpop.f32.mrb[0].mxu0
    %v2348 = vpop.f32.mrb[0].mxu0
    %v2349 = vadd.f32 %v2029, %v2348
    %v2350 = vpop.f32.mrb[0].mxu0
    %2351 = vmatprep.mubr.bf16.mxu0 %v1977
    %2352 = vmatmul.mubr.bf16.gmra.mrb[0].mxu0 %v1976
    %v2353 = vpop.f32.mrb[0].mxu0
    %v2354 = vadd.f32 %v2029, %v2353
    %v2355 = vpop.f32.mrb[0].mxu0
    %v2356 = vpop.f32.mrb[0].mxu0
    %v2357 = vadd.f32 %v2029, %v2356
    %v2358 = vpop.f32.mrb[0].mxu0
    %2359 = vmatprep.mubr.bf16.mxu0 %v1979
    %2360 = vmatmul.mubr.bf16.gmra.mrb[0].mxu0 %v1978
    %v2361 = vpop.f32.mrb[0].mxu0
    %v2362 = vadd.f32 %v2029, %v2361
    %v2363 = vpop.f32.mrb[0].mxu0
    %v2364 = vpop.f32.mrb[0].mxu0
    %v2365 = vadd.f32 %v2029, %v2364
    %v2366 = vpop.f32.mrb[0].mxu0
    %2367 = vmatprep.mubr.bf16.mxu0 %v1981
    %2368 = vmatmul.mubr.bf16.gmra.mrb[0].mxu0 %v1980
    %v2369 = vpop.f32.mrb[0].mxu0
    %v2370 = vadd.f32 %v2029, %v2369
    %v2371 = vpop.f32.mrb[0].mxu0
    %v2372 = vpop.f32.mrb[0].mxu0
    %v2373 = vadd.f32 %v2029, %v2372
    %v2374 = vpop.f32.mrb[0].mxu0
    %2375 = vmatprep.mubr.bf16.mxu0 %v1983
    %2376 = vmatmul.mubr.bf16.gmra.mrb[0].mxu0 %v1982
    %v2377 = vpop.f32.mrb[0].mxu0
    %v2378 = vadd.f32 %v2029, %v2377
    %v2379 = vpop.f32.mrb[0].mxu0
    %v2380 = vpop.f32.mrb[0].mxu0
    %v2381 = vadd.f32 %v2029, %v2380
    %v2382 = vpop.f32.mrb[0].mxu0
    %2383 = vmatprep.mubr.bf16.mxu0 %v1985
    %2384 = vmatmul.mubr.bf16.gmra.mrb[0].mxu0 %v1984
    %v2385 = vpop.f32.mrb[0].mxu0
    %v2386 = vadd.f32 %v2029, %v2385
    %v2387 = vpop.f32.mrb[0].mxu0
    %v2388 = vpop.f32.mrb[0].mxu0
    %v2389 = vadd.f32 %v2029, %v2388
    %v2390 = vpop.f32.mrb[0].mxu0
    %2391 = vmatprep.mubr.bf16.mxu0 %v1987
    %2392 = vmatmul.mubr.bf16.gmra.mrb[0].mxu0 %v1986
    %v2393 = vpop.f32.mrb[0].mxu0
    %v2394 = vadd.f32 %v2029, %v2393
    %v2395 = vpop.f32.mrb[0].mxu0
    %v2396 = vpop.f32.mrb[0].mxu0
    %v2397 = vadd.f32 %v2029, %v2396
    %v2398 = vpop.f32.mrb[0].mxu0
    %2399 = vmatprep.mubr.bf16.mxu0 %v1989
    %2400 = vmatmul.mubr.bf16.gmra.mrb[0].mxu0 %v1988
    %v2401 = vpop.f32.mrb[0].mxu0
    %v2402 = vadd.f32 %v2029, %v2401
    %v2403 = vpop.f32.mrb[0].mxu0
    %v2404 = vpop.f32.mrb[0].mxu0
    %v2405 = vadd.f32 %v2029, %v2404
    %v2406 = vpop.f32.mrb[0].mxu0
    %2407 = vmatprep.mubr.bf16.mxu0 %v1991
    %2408 = vmatmul.mubr.bf16.gmra.mrb[0].mxu0 %v1990
    %v2409 = vpop.f32.mrb[0].mxu0
    %v2410 = vadd.f32 %v2029, %v2409
    %v2411 = vpop.f32.mrb[0].mxu0
    %v2412 = vpop.f32.mrb[0].mxu0
    %v2413 = vadd.f32 %v2029, %v2412
    %v2414 = vpop.f32.mrb[0].mxu0
    %2415 = vdwg.mxu0
    %2416 = vst [vmem:[#allocation11] sm:$0xff] %v2162
    %2417 = vst [vmem:[#allocation11 + $0x8] sm:$0xff] %v2165
    %2418 = vst [vmem:[#allocation11 + $0x10] sm:$0xff] %v2170
    %2419 = vst [vmem:[#allocation11 + $0x18] sm:$0xff] %v2173
    %2420 = vst [vmem:[#allocation11 + $0x20] sm:$0xff] %v2178
    %2421 = vst [vmem:[#allocation11 + $0x28] sm:$0xff] %v2181
    %2422 = vst [vmem:[#allocation11 + $0x30] sm:$0xff] %v2186
    %2423 = vst [vmem:[#allocation11 + $0x38] sm:$0xff] %v2189
    %2424 = vst [vmem:[#allocation11 + $0x40] sm:$0xff] %v2194
    %2425 = vst [vmem:[#allocation11 + $0x48] sm:$0xff] %v2197
    %2426 = vst [vmem:[#allocation11 + $0x50] sm:$0xff] %v2202
    %2427 = vst [vmem:[#allocation11 + $0x58] sm:$0xff] %v2205
    %2428 = vst [vmem:[#allocation11 + $0x60] sm:$0xff] %v2210
    %2429 = vst [vmem:[#allocation11 + $0x68] sm:$0xff] %v2213
    %2430 = vst [vmem:[#allocation11 + $0x70] sm:$0xff] %v2218
    %2431 = vst [vmem:[#allocation11 + $0x78] sm:$0xff] %v2221
    %2432 = vst [vmem:[#allocation11 + $0x80] sm:$0xff] %v2226
    %2433 = vst [vmem:[#allocation11 + $0x88] sm:$0xff] %v2229
    %2434 = vst [vmem:[#allocation11 + $0x90] sm:$0xff] %v2234
    %2435 = vst [vmem:[#allocation11 + $0x98] sm:$0xff] %v2237
    %2436 = vst [vmem:[#allocation11 + $0xa0] sm:$0xff] %v2242
    %2437 = vst [vmem:[#allocation11 + $0xa8] sm:$0xff] %v2245
    %2438 = vst [vmem:[#allocation11 + $0xb0] sm:$0xff] %v2250
    %2439 = vst [vmem:[#allocation11 + $0xb8] sm:$0xff] %v2253
    %2440 = vst [vmem:[#allocation11 + $0xc0] sm:$0xff] %v2258
    %2441 = vst [vmem:[#allocation11 + $0xc8] sm:$0xff] %v2261
    %2442 = vst [vmem:[#allocation11 + $0xd0] sm:$0xff] %v2266
    %2443 = vst [vmem:[#allocation11 + $0xd8] sm:$0xff] %v2269
    %2444 = vst [vmem:[#allocation11 + $0xe0] sm:$0xff] %v2274
    %2445 = vst [vmem:[#allocation11 + $0xe8] sm:$0xff] %v2277
    %2446 = vst [vmem:[#allocation11 + $0xf0] sm:$0xff] %v2282
    %2447 = vst [vmem:[#allocation11 + $0xf8] sm:$0xff] %v2285
    %2448 = vst [vmem:[#allocation11 + $0x100] sm:$0xff] %v2290
    %2449 = vst [vmem:[#allocation11 + $0x108] sm:$0xff] %v2293
    %2450 = vst [vmem:[#allocation11 + $0x110] sm:$0xff] %v2298
    %2451 = vst [vmem:[#allocation11 + $0x118] sm:$0xff] %v2301
    %2452 = vst [vmem:[#allocation11 + $0x120] sm:$0xff] %v2306
    %2453 = vst [vmem:[#allocation11 + $0x128] sm:$0xff] %v2309
    %2454 = vst [vmem:[#allocation11 + $0x130] sm:$0xff] %v2314
    %2455 = vst [vmem:[#allocation11 + $0x138] sm:$0xff] %v2317
    %2456 = vst [vmem:[#allocation11 + $0x140] sm:$0xff] %v2322
    %2457 = vst [vmem:[#allocation11 + $0x148] sm:$0xff] %v2325
    %2458 = vst [vmem:[#allocation11 + $0x150] sm:$0xff] %v2330
    %2459 = vst [vmem:[#allocation11 + $0x158] sm:$0xff] %v2333
    %2460 = vst [vmem:[#allocation11 + $0x160] sm:$0xff] %v2338
    %2461 = vst [vmem:[#allocation11 + $0x168] sm:$0xff] %v2341
    %2462 = vst [vmem:[#allocation11 + $0x170] sm:$0xff] %v2346
    %2463 = vst [vmem:[#allocation11 + $0x178] sm:$0xff] %v2349
    %2464 = vst [vmem:[#allocation11 + $0x180] sm:$0xff] %v2354
    %2465 = vst [vmem:[#allocation11 + $0x188] sm:$0xff] %v2357
    %2466 = vst [vmem:[#allocation11 + $0x190] sm:$0xff] %v2362
    %2467 = vst [vmem:[#allocation11 + $0x198] sm:$0xff] %v2365
    %2468 = vst [vmem:[#allocation11 + $0x1a0] sm:$0xff] %v2370
    %2469 = vst [vmem:[#allocation11 + $0x1a8] sm:$0xff] %v2373
    %2470 = vst [vmem:[#allocation11 + $0x1b0] sm:$0xff] %v2378
    %2471 = vst [vmem:[#allocation11 + $0x1b8] sm:$0xff] %v2381
    %2472 = vst [vmem:[#allocation11 + $0x1c0] sm:$0xff] %v2386
    %2473 = vst [vmem:[#allocation11 + $0x1c8] sm:$0xff] %v2389
    %2474 = vst [vmem:[#allocation11 + $0x1d0] sm:$0xff] %v2394
    %2475 = vst [vmem:[#allocation11 + $0x1d8] sm:$0xff] %v2397
    %2476 = vst [vmem:[#allocation11 + $0x1e0] sm:$0xff] %v2402
    %2477 = vst [vmem:[#allocation11 + $0x1e8] sm:$0xff] %v2405
    %2478 = vst [vmem:[#allocation11 + $0x1f0] sm:$0xff] %v2410
    %2479 = vst [vmem:[#allocation11 + $0x1f8] sm:$0xff] %v2413
    // Predicated region
    $region42: #{tpu_custom_call.1} parent=1 // pred_check
      _
    $region43: #{tpu_custom_call.1} parent=1 // pred_check_branch
      %2481 = sbr.rel (0) target = $region45
    $region44: #{tpu_custom_call.1} parent=1 // pred_region
      %s2483 = ssub.s32 8192, 8192
      %2484 = vsyncadd [#allocation4], %s2483
      %s2485 = sshll.u32 [#allocation11], 4
      %s2486 = int_to_ptr.vmem [resolvable:$true] %s2485
      %2491 = dma.vmem_to_hbm [thread:$0]  %s2486, 8192, %s5, [#allocation4], 128, 128, 8
    $region45: #{tpu_custom_call.1} parent=1 // pred_fallthru
      _
    // Predicated region
    $region46: #{tpu_custom_call.1} parent=1 // pred_check
      _
    $region47: #{tpu_custom_call.1} parent=1 // pred_check_branch
      %2493 = sbr.rel (0) target = $region49
    $region48: #{tpu_custom_call.1} parent=1 // pred_region
      %2494 = dma.done [#allocation4], 8192
    $region49: #{tpu_custom_call.1} parent=1 // pred_fallthru
      _
    %2495 = vsyncpa [#allocation3], 1
    %2496 = vsyncpa [#allocation6], 1
    %2497 = vsyncpa [#allocation9], 1
    %2498 = vsyncpa [#allocation4], 1

</llo_original>
